<compile_context>
chip_gen: v6e
topology: v6e:2x2x1
jax: 0.10.0
libtpu: 0.0.40
codegen_flags: <defaults>
</compile_context>

<pallas_src>
import functools

import jax
import jax.numpy as jnp
from jax import lax
from jax.experimental import pallas as pl
from jax.experimental.pallas import tpu as pltpu


def _round_up(x, m):
    return ((x + m - 1) // m) * m


def _pick_tile(n, max_tile):
    """Largest divisor of n <= max_tile that is a multiple of 8 or the full
    dimension (keeps BlockSpecs (8,128)-legal).
    TODO(synk): for awkward user sizes (e.g. B=130) pad the arrays up to a
    multiple of 8 in the wrapper instead of falling back to the full dim."""
    for d in range(min(n, max_tile), 0, -1):
        if n % d == 0 and (d % 8 == 0 or d == n):
            return d
    return n


def _vmem_limit_bytes():
    """Per-generation scoped-VMEM budget: raise the 16/32 MiB defaults while
    leaving headroom inside the physical capacity (v7x is only 64 MiB)."""
    cap = 64 * 1024 * 1024
    try:
        info = pltpu.get_tpu_info()
        cap = int(getattr(info, "vmem_capacity_bytes", cap)) or cap
    except Exception:
        pass
    return int(cap * 3 // 4)


# ----------------------------------------------------------------------------
# 1) Fused input projection: gi[d] = X @ W_ih_rzn[d] + b_ih_rzn[d], d in {f,b}.
#    Gates r|z|n are concatenated on the lane axis -> one MXU matmul per
#    direction instead of three, one lane-dense output stream.
# ----------------------------------------------------------------------------
def input_proj_kernel(x_ref, wf_ref, wb_ref, bf_ref, bb_ref, gi_ref):
    x = x_ref[...]                                              # (nt, K) bf16
    gf = jnp.dot(x, wf_ref[...], preferred_element_type=jnp.float32) + bf_ref[...]
    gb = jnp.dot(x, wb_ref[...], preferred_element_type=jnp.float32) + bb_ref[...]
    gi_ref[0] = gf.astype(gi_ref.dtype)
    gi_ref[1] = gb.astype(gi_ref.dtype)


def input_projection(x2, w_f, w_b, b_f, b_b, *, vmem_limit):
    N, K = x2.shape
    G = w_f.shape[1]                                            # 3H
    per_row = (K + 2 * G) * 2                                   # bf16 bytes/row
    nt = _pick_tile(N, max(8, min(512, (vmem_limit // 4) // max(per_row, 1))))
    row = lambda i: (i, 0)
    rep = lambda i: (0, 0)
    return pl.pallas_call(
        input_proj_kernel,
        out_shape=jax.ShapeDtypeStruct((2, N, G), jnp.bfloat16),
        grid_spec=pltpu.PrefetchScalarGridSpec(
            num_scalar_prefetch=0,
            grid=(N // nt,),
            in_specs=[
                pl.BlockSpec((nt, K), row),
                pl.BlockSpec((K, G), rep),
                pl.BlockSpec((K, G), rep),
                pl.BlockSpec((1, G), rep),
                pl.BlockSpec((1, G), rep),
            ],
            out_specs=pl.BlockSpec((2, nt, G), lambda i: (0, i, 0)),
        ),
        compiler_params=pltpu.CompilerParams(
            dimension_semantics=("parallel",),
            vmem_limit_bytes=vmem_limit),
    )(x2, w_f, w_b, b_f, b_b)


# ----------------------------------------------------------------------------
# 2) Bidirectional GRU recurrence (time-major, fused gates, both directions
#    on a leading "parallel" grid axis).
#    PyTorch gate math (gi already includes b_ih):
#      gh = h @ W_hh_rzn + b_hh_rzn
#      r = sigmoid(gi_r + gh_r); z = sigmoid(gi_z + gh_z)
#      n = tanh(gi_n + r * gh_n); h' = (1 - z) * n + z * h
# ----------------------------------------------------------------------------
def gru_chunk_kernel(gi_ref, whh_ref, bhh_ref, h0_ref, y_ref, hT_ref, h_scr,
                     *, chunk, H):
    d = pl.program_id(0)            # direction (parallel axis: 0=fwd, 1=bwd)
    c = pl.program_id(1)            # time chunk (serial / "arbitrary" axis)
    is_fwd = d == 0

    @pl.when(c == 0)
    def _init():
        h_scr[...] = h0_ref[...].astype(jnp.float32)

    whh = whh_ref[...]              # (H, 3H) bf16 -- hoisted out of the loop
    bhh = bhh_ref[...]              # (1, 3H) f32

    def step(i, h):
        # Chunk-local time index; chunks are already reversed for the backward
        # direction by the index_map, so reverse inside the chunk as well.
        t = jnp.where(is_fwd, i, chunk - 1 - i)
        gi = gi_ref[t].astype(jnp.float32)                        # (B, 3H)
        # Single fused h @ W_hh_rzn MXU push per timestep (bf16 operands,
        # f32 accumulation).  Gate math stays f32 (v5e: no bf16 VPU/EUP).
        gh = jnp.dot(h.astype(jnp.bfloat16), whh,
                     preferred_element_type=jnp.float32) + bhh    # (B, 3H)
        r = jax.nn.sigmoid(gi[:, :H] + gh[:, :H])
        z = jax.nn.sigmoid(gi[:, H:2 * H] + gh[:, H:2 * H])
        n = jnp.tanh(gi[:, 2 * H:] + r * gh[:, 2 * H:])
        h_new = (1.0 - z) * n + z * h
        y_ref[t] = h_new.astype(y_ref.dtype)                      # dense (B,H)
        return h_new

    # fori_loop (not a fully unrolled Python loop) bounds vreg live ranges;
    # modest unroll keeps the LLO scheduler fed without spilling at big B*H.
    h = lax.fori_loop(0, chunk, step, h_scr[...], unroll=min(chunk, 8))
    h_scr[...] = h

    # NOTE: hT's output block index is invariant across the serial chunk axis;
    # it must only ever be written on the final chunk of each direction.
    @pl.when(c == pl.num_programs(1) - 1)
    def _final():
        hT_ref[...] = h.astype(hT_ref.dtype)


def gru_bidir(gi, w_hh, b_hh, h0, *, H, vmem_limit):
    """gi: time-major fused input projection (2, T, B, 3H) bf16.
    Returns y (2, T, B, H) bf16 (natural time order) and final hidden (2, B, H)."""
    _, T, B, G = gi.shape
    per_t = 2 * B * (G + H) * 2            # double-buffered bf16 bytes / step
    tc = _pick_tile(T, max(1, min(64, (vmem_limit // 4) // max(per_t, 1))))
    nc = T // tc

    # Direction-dependent chunk walk (bwd walks chunks back-to-front).  The
    # same map drives gi reads and y writes, so backward outputs land at their
    # natural time positions (pad_packed_sequence semantics).
    def t_map(d, c):
        return (d, (1 - d) * c + d * (nc - 1 - c), 0, 0)

    def d_map(d, c):
        return (d, 0, 0)

    kernel = functools.partial(gru_chunk_kernel, chunk=tc, H=H)
    return pl.pallas_call(
        kernel,
        out_shape=(jax.ShapeDtypeStruct((2, T, B, H), jnp.bfloat16),
                   jax.ShapeDtypeStruct((2, B, H), jnp.float32)),
        grid_spec=pltpu.PrefetchScalarGridSpec(
            num_scalar_prefetch=0,
            grid=(2, nc),
            in_specs=[
                pl.BlockSpec((None, tc, B, G), t_map),
                pl.BlockSpec((None, H, G), d_map),
                pl.BlockSpec((None, 1, G), d_map),
                pl.BlockSpec((None, B, H), d_map),
            ],
            out_specs=(
                pl.BlockSpec((None, tc, B, H), t_map),
                pl.BlockSpec((None, B, H), d_map),
            ),
            scratch_shapes=[pltpu.VMEM((B, H), jnp.float32)],
        ),
        compiler_params=pltpu.CompilerParams(
            dimension_semantics=("parallel", "arbitrary"),
            vmem_limit_bytes=vmem_limit),
    )(gi, w_hh, b_hh, h0)


# ----------------------------------------------------------------------------
# 3) Attention + output head, tiled over batch.
#      e[b,t]  = tanh(<rnn[b,t,:], w_align> + b_align)
#      alpha   = softmax(e, axis=-1)
#      context = sum_t alpha[b,t] * rnn[b,t,:]     (VPU weighted sum, q = 1)
#      logits  = context @ W_out^T + b_out         (lane-dense padded head)
# ----------------------------------------------------------------------------
def attn_out_kernel(rf_ref, rb_ref, waf_ref, wab_ref, ba_ref,
                    wof_ref, wob_ref, bo_ref, logits_ref, alpha_ref,
                    *, T, T_pad):
    rf = rf_ref[...].astype(jnp.float32)                  # (tb, T, H)
    rb = rb_ref[...].astype(jnp.float32)

    # Alignment scores: rank-1 contraction over H on the VPU/XLU.
    e = (jnp.sum(rf * waf_ref[...][None], axis=-1)
         + jnp.sum(rb * wab_ref[...][None], axis=-1)
         + ba_ref[...])                                   # (tb, T)
    e = jnp.tanh(e)

    # Lane-dense softmax: pad scores with -inf mass so the padded alpha lanes
    # come out exactly zero and the (tb, T_pad) store is an unmasked vst.
    if T_pad > T:
        e = jnp.concatenate(
            [e, jnp.full((e.shape[0], T_pad - T), -1e30, jnp.float32)], axis=-1)
    e_max = jnp.max(e, axis=-1, keepdims=True)
    p = jnp.exp(e - e_max)
    alpha_full = p * pl.reciprocal(jnp.sum(p, axis=-1, keepdims=True), approx=True)
    alpha = alpha_full[:, :T]                             # (tb, T)

    # q = 1 context: broadcast-multiply + reduce over T (keeps the MXU free).
    ctx_f = jnp.sum(alpha[:, :, None] * rf, axis=1)       # (tb, H) f32
    ctx_b = jnp.sum(alpha[:, :, None] * rb, axis=1)

    # Output head on the MXU against the zero-padded (H, L_pad) weights.
    logits = (jnp.dot(ctx_f.astype(jnp.bfloat16), wof_ref[...],
                      preferred_element_type=jnp.float32)
              + jnp.dot(ctx_b.astype(jnp.bfloat16), wob_ref[...],
                        preferred_element_type=jnp.float32)
              + bo_ref[...])                              # (tb, L_pad)

    logits_ref[...] = logits.astype(logits_ref.dtype)
    alpha_ref[...] = alpha_full.astype(alpha_ref.dtype)


def attention_output(rnn_f, rnn_b, wa_f, wa_b, b_align, wo_f, wo_b, b_out,
                     *, vmem_limit):
    B, T, H = rnn_f.shape
    L = wo_f.shape[1]
    L_pad = _round_up(L, 128)
    T_pad = _round_up(T, 128)
    # Zero-pad the head so the logits/alpha stores are lane-dense; stripped below.
    wo_f_p = jnp.pad(wo_f, ((0, 0), (0, L_pad - L)))
    wo_b_p = jnp.pad(wo_b, ((0, 0), (0, L_pad - L)))
    bo_p = jnp.pad(b_out, ((0, 0), (0, L_pad - L)))

    per_b = 2 * T * H * 2 * 2                       # bf16 rf+rb, double-buffered
    tb = _pick_tile(B, max(8, min(256, (vmem_limit // 4) // max(per_b, 1))))
    bmap = lambda i: (i, 0, 0)
    omap = lambda i: (i, 0)
    rep = lambda i: (0, 0)
    kernel = functools.partial(attn_out_kernel, T=T, T_pad=T_pad)
    logits_p, alpha_p = pl.pallas_call(
        kernel,
        out_shape=(jax.ShapeDtypeStruct((B, L_pad), jnp.float32),
                   jax.ShapeDtypeStruct((B, T_pad), jnp.float32)),
        grid_spec=pltpu.PrefetchScalarGridSpec(
            num_scalar_prefetch=0,
            grid=(B // tb,),
            in_specs=[
                pl.BlockSpec((tb, T, H), bmap),
                pl.BlockSpec((tb, T, H), bmap),
                pl.BlockSpec((1, H), rep),
                pl.BlockSpec((1, H), rep),
                pl.BlockSpec((1, 1), rep),
                pl.BlockSpec((H, L_pad), rep),
                pl.BlockSpec((H, L_pad), rep),
                pl.BlockSpec((1, L_pad), rep),
            ],
            out_specs=(pl.BlockSpec((tb, L_pad), omap),
                       pl.BlockSpec((tb, T_pad), omap)),
        ),
        compiler_params=pltpu.CompilerParams(
            dimension_semantics=("parallel",),
            vmem_limit_bytes=vmem_limit),
    )(rnn_f, rnn_b, wa_f, wa_b, b_align, wo_f_p, wo_b_p, bo_p)
    return logits_p[:, :L], alpha_p[:, :T]


# ----------------------------------------------------------------------------
# Full forward pass (glue in plain JAX, compute in Pallas kernels).
# ----------------------------------------------------------------------------
def basic_attn_forward(kparams, input_ids, input_lengths, hidden, *,
                       n_layer, hidden_size):
    # TODO(synk): pack_padded_sequence / variable-length masking not modeled;
    #             assumes all input_lengths equal the padded sequence length.
    del input_lengths
    H = hidden_size
    B, T = input_ids.shape
    vmem_limit = _vmem_limit_bytes()

    # Time-major embedding (T, B, E): keeps every per-timestep GRU access a
    # dense (B, .) tile; bf16 on the MXU-facing side.
    x = jnp.take(kparams['embedding'], input_ids.T, axis=0).astype(jnp.bfloat16)

    h_finals = []
    y = None
    for l in range(n_layer):
        p = kparams['gru'][l]
        in_size = x.shape[-1]
        x2 = x.reshape(T * B, in_size)                    # free, row-major
        gi = input_projection(x2, p['w_ih_f'], p['w_ih_b'],
                              p['b_ih_f'], p['b_ih_b'],
                              vmem_limit=vmem_limit)      # (2, T*B, 3H) bf16
        gi = gi.reshape(2, T, B, 3 * H)
        y, hT = gru_bidir(gi, p['w_hh'], p['b_hh'], hidden[2 * l:2 * l + 2],
                          H=H, vmem_limit=vmem_limit)
        h_finals.append(hT[0])
        h_finals.append(hT[1])
        if l + 1 < n_layer:
            # TODO(synk): inter-layer dropout (training-only) not applied.
            x = jnp.concatenate([y[0], y[1]], axis=-1)    # (T, B, 2H) bf16

    hidden_out = jnp.stack(h_finals, axis=0)              # (n_layer*2, B, H)

    # One cheap batch-major transpose of the last layer's outputs feeds the
    # attention head (keeps the serial loop's loads/stores time-major+dense).
    rnn_f = jnp.transpose(y[0], (1, 0, 2))                # (B, T, H) bf16
    rnn_b = jnp.transpose(y[1], (1, 0, 2))

    logits, alpha = attention_output(
        rnn_f, rnn_b, kparams['wa_f'], kparams['wa_b'], kparams['b_align'],
        kparams['wo_f'], kparams['wo_b'], kparams['b_out'],
        vmem_limit=vmem_limit)
    # NOTE: self.softmax (LogSoftmax) is defined in __init__ but never applied
    # in forward(), so logits are the raw linear output -- matched here.
    return logits, hidden_out, alpha


# ----------------------------------------------------------------------------
# Parameters: init in PyTorch layout, convert once to fused kernel layout
# (per-direction, gate-fused, pre-transposed, bf16 MXU operands).
# ----------------------------------------------------------------------------
def init_params(key, num_embeddings, E, H, L, n_layer):
    def uniform(k, shape, bound):
        return jax.random.uniform(k, shape, jnp.float32, -bound, bound)

    keys = iter(jax.random.split(key, 8 * n_layer + 8))
    kh = 1.0 / (H ** 0.5)
    ko = 1.0 / ((2 * H) ** 0.5)

    params = {'embedding': 0.1 * jax.random.normal(
        next(keys), (num_embeddings, E), jnp.float32)}   # "pretrained_weight"

    gru = []
    for l in range(n_layer):
        in_size = E if l == 0 else 2 * H
        layer = {}
        for d in ('fwd', 'bwd'):
            layer[d] = dict(
                w_ih=uniform(next(keys), (3 * H, in_size), kh),
                w_hh=uniform(next(keys), (3 * H, H), kh),
                b_ih=uniform(next(keys), (3 * H,), kh),
                b_hh=uniform(next(keys), (3 * H,), kh),
            )
        gru.append(layer)
    params['gru'] = gru

    params['w_align'] = uniform(next(keys), (1, 2 * H), ko)
    params['b_align'] = uniform(next(keys), (1,), ko)
    params['w_out'] = uniform(next(keys), (L, 2 * H), ko)
    params['b_out'] = uniform(next(keys), (L,), ko)
    return params


def prepare_params(params, n_layer, H):
    kp = {'embedding': params['embedding']}
    gru = []
    for l in range(n_layer):
        pf = params['gru'][l]['fwd']
        pb = params['gru'][l]['bwd']
        # PyTorch packs [W_r; W_z; W_n] on the rows; transposing gives the
        # gate-fused (in, 3H) / (H, 3H) layouts the kernels slice as r|z|n.
        layer = dict(
            w_ih_f=jnp.transpose(pf['w_ih']).astype(jnp.bfloat16),   # (in, 3H)
            w_ih_b=jnp.transpose(pb['w_ih']).astype(jnp.bfloat16),
            b_ih_f=pf['b_ih'][None, :],                               # (1, 3H) f32
            b_ih_b=pb['b_ih'][None, :],
            w_hh=jnp.stack([jnp.transpose(pf['w_hh']),
                            jnp.transpose(pb['w_hh'])], 0).astype(jnp.bfloat16),
            b_hh=jnp.stack([pf['b_hh'][None, :], pb['b_hh'][None, :]], 0),
        )
        gru.append(layer)
    kp['gru'] = gru
    kp['wa_f'] = params['w_align'][:, :H]                 # (1, H) f32 (VPU side)
    kp['wa_b'] = params['w_align'][:, H:]
    kp['b_align'] = params['b_align'].reshape(1, 1)       # (1, 1)
    kp['wo_f'] = jnp.transpose(params['w_out'][:, :H]).astype(jnp.bfloat16)  # (H, L)
    kp['wo_b'] = jnp.transpose(params['w_out'][:, H:]).astype(jnp.bfloat16)
    kp['b_out'] = params['b_out'][None, :]                # (1, L) f32
    return kp


# ----------------------------------------------------------------------------
# Pure-JAX f32 reference (PyTorch-layout params) for a runtime sanity check.
# ----------------------------------------------------------------------------
def reference_forward(params, input_ids, hidden, n_layer, H):
    emb = jnp.take(params['embedding'], input_ids.T, axis=0)   # (T, B, E)

    def run_dir(x, p, h0):
        hs, h = [], h0
        for t in range(x.shape[0]):
            gi = x[t] @ p['w_ih'].T + p['b_ih']
            gh = h @ p['w_hh'].T + p['b_hh']
            r = jax.nn.sigmoid(gi[:, :H] + gh[:, :H])
            z = jax.nn.sigmoid(gi[:, H:2 * H] + gh[:, H:2 * H])
            n = jnp.tanh(gi[:, 2 * H:] + r * gh[:, 2 * H:])
            h = (1.0 - z) * n + z * h
            hs.append(h)
        return jnp.stack(hs, axis=0), h

    layer_in, h_finals = emb, []
    for l in range(n_layer):
        y_f, hT_f = run_dir(layer_in, params['gru'][l]['fwd'], hidden[2 * l])
        y_b_rev, hT_b = run_dir(layer_in[::-1], params['gru'][l]['bwd'],
                                hidden[2 * l + 1])
        layer_in = jnp.concatenate([y_f, y_b_rev[::-1]], axis=-1)
        h_finals += [hT_f, hT_b]

    rnn = layer_in                                              # (T, B, 2H)
    e = jnp.tanh(jnp.einsum('tbd,d->tb', rnn, params['w_align'][0])
                 + params['b_align'][0]).T                      # (B, T)
    alpha = jax.nn.softmax(e, axis=-1)
    ctx = jnp.einsum('bt,btd->bd', alpha, jnp.transpose(rnn, (1, 0, 2)))
    logits = ctx @ params['w_out'].T + params['b_out']
    return logits, jnp.stack(h_finals, axis=0), alpha


if __name__ == "__main__":
    key = jax.random.PRNGKey(0)
    num_embeddings, E, H, L, n_layer = 50, 32, 32, 4, 1
    B, T = 2, 8

    k_params, k_ids = jax.random.split(key)
    params = init_params(k_params, num_embeddings, E, H, L, n_layer)
    kparams = prepare_params(params, n_layer, H)

    input_ids = jax.random.randint(k_ids, (B, T), 0, num_embeddings, dtype=jnp.int32)
    input_lengths = jnp.full((B,), T, dtype=jnp.int32)
    hidden0 = jnp.zeros((n_layer * 2, B, H), jnp.float32)       # initHidden

    fwd = jax.jit(functools.partial(basic_attn_forward,
                                    n_layer=n_layer, hidden_size=H))
    logits, hidden_out, alpha = fwd(kparams, input_ids, input_lengths, hidden0)
    jax.block_until_ready((logits, hidden_out, alpha))

    ref_logits, ref_hidden, ref_alpha = reference_forward(
        params, input_ids, hidden0, n_layer, H)

    assert logits.shape == (B, L)
    assert hidden_out.shape == (n_layer * 2, B, H)
    assert alpha.shape == (B, T)
    # Tolerances account for bf16 MXU operands (f32 accumulation / f32 carry).
    assert jnp.allclose(logits, ref_logits, atol=2e-2, rtol=2e-2)
    assert jnp.allclose(hidden_out, ref_hidden, atol=2e-2, rtol=2e-2)
    assert jnp.allclose(alpha, ref_alpha, atol=2e-2, rtol=2e-2)

    print("KERNEL_OK")
</pallas_src>

<mosaic_0001>
module attributes {stable_mosaic.version = 11 : i64} {
  func.func @input_proj_kernel(%arg0: i32, %arg1: memref<16x32xbf16, #tpu.memory_space<vmem>>, %arg2: memref<32x96xbf16, #tpu.memory_space<vmem>>, %arg3: memref<32x96xbf16, #tpu.memory_space<vmem>>, %arg4: memref<1x96xf32, #tpu.memory_space<vmem>>, %arg5: memref<1x96xf32, #tpu.memory_space<vmem>>, %arg6: memref<2x16x96xbf16, #tpu.memory_space<vmem>>) attributes {dimension_semantics = [#tpu.dimension_semantics<parallel>], iteration_bounds = array<i64: 1>, scalar_prefetch = 0 : i64, scratch_operands = 0 : i64, tpu.core_type = #tpu.core_type<tc>, window_params = [{transform_indices = @transform_0, window_bounds = array<i64: 16, 32>}, {pipeline_mode = #tpu.pipeline_mode<synchronous>, transform_indices = @transform_1, window_bounds = array<i64: 32, 96>}, {pipeline_mode = #tpu.pipeline_mode<synchronous>, transform_indices = @transform_2, window_bounds = array<i64: 32, 96>}, {pipeline_mode = #tpu.pipeline_mode<synchronous>, transform_indices = @transform_3, window_bounds = array<i64: 1, 96>}, {pipeline_mode = #tpu.pipeline_mode<synchronous>, transform_indices = @transform_4, window_bounds = array<i64: 1, 96>}, {transform_indices = @transform_5, window_bounds = array<i64: 2, 16, 96>}]} {
    %c0 = arith.constant 0 : index
    %c0_0 = arith.constant 0 : index
    %0 = vector.load %arg1[%c0, %c0_0] : memref<16x32xbf16, #tpu.memory_space<vmem>>, vector<16x32xbf16>
    %c0_1 = arith.constant 0 : index
    %c0_2 = arith.constant 0 : index
    %1 = vector.load %arg2[%c0_1, %c0_2] : memref<32x96xbf16, #tpu.memory_space<vmem>>, vector<32x96xbf16>
    %cst = arith.constant dense<0.000000e+00> : vector<16x96xf32>
    %2 = tpu.matmul %0, %1, %cst {dimension_numbers = #tpu.dot_dimension_numbers<[1], [0], [0], [1], [0, 0, 1, 1], [], []>} : vector<16x32xbf16>, vector<32x96xbf16>, vector<16x96xf32> -> vector<16x96xf32>
    %c0_3 = arith.constant 0 : index
    %c0_4 = arith.constant 0 : index
    %3 = vector.load %arg4[%c0_3, %c0_4] : memref<1x96xf32, #tpu.memory_space<vmem>>, vector<1x96xf32>
    %4 = vector.broadcast %3 : vector<1x96xf32> to vector<16x96xf32>
    %5 = arith.addf %2, %4 : vector<16x96xf32>
    %c0_5 = arith.constant 0 : index
    %c0_6 = arith.constant 0 : index
    %6 = vector.load %arg3[%c0_5, %c0_6] : memref<32x96xbf16, #tpu.memory_space<vmem>>, vector<32x96xbf16>
    %cst_7 = arith.constant dense<0.000000e+00> : vector<16x96xf32>
    %7 = tpu.matmul %0, %6, %cst_7 {dimension_numbers = #tpu.dot_dimension_numbers<[1], [0], [0], [1], [0, 0, 1, 1], [], []>} : vector<16x32xbf16>, vector<32x96xbf16>, vector<16x96xf32> -> vector<16x96xf32>
    %c0_8 = arith.constant 0 : index
    %c0_9 = arith.constant 0 : index
    %8 = vector.load %arg5[%c0_8, %c0_9] : memref<1x96xf32, #tpu.memory_space<vmem>>, vector<1x96xf32>
    %9 = vector.broadcast %8 : vector<1x96xf32> to vector<16x96xf32>
    %10 = arith.addf %7, %9 : vector<16x96xf32>
    %11 = arith.truncf %5 : vector<16x96xf32> to vector<16x96xbf16>
    %c0_10 = arith.constant 0 : index
    %c0_11 = arith.constant 0 : index
    %c0_12 = arith.constant 0 : index
    %12 = vector.load %arg6[%c0_10, %c0_11, %c0_12] : memref<2x16x96xbf16, #tpu.memory_space<vmem>>, vector<1x16x96xbf16>
    %13 = vector.shape_cast %12 : vector<1x16x96xbf16> to vector<16x96xbf16>
    %14 = vector.shape_cast %11 : vector<16x96xbf16> to vector<1x16x96xbf16>
    tpu.vector_store %arg6[%c0_10, %c0_11, %c0_12], %14 {strides = array<i32>} : memref<2x16x96xbf16, #tpu.memory_space<vmem>>, vector<1x16x96xbf16>,
    %15 = arith.truncf %10 : vector<16x96xf32> to vector<16x96xbf16>
    %c1 = arith.constant 1 : index
    %c0_13 = arith.constant 0 : index
    %c0_14 = arith.constant 0 : index
    %16 = vector.load %arg6[%c1, %c0_13, %c0_14] : memref<2x16x96xbf16, #tpu.memory_space<vmem>>, vector<1x16x96xbf16>
    %17 = vector.shape_cast %16 : vector<1x16x96xbf16> to vector<16x96xbf16>
    %18 = vector.shape_cast %15 : vector<16x96xbf16> to vector<1x16x96xbf16>
    tpu.vector_store %arg6[%c1, %c0_13, %c0_14], %18 {strides = array<i32>} : memref<2x16x96xbf16, #tpu.memory_space<vmem>>, vector<1x16x96xbf16>,
    return
  }
  func.func @transform_0(%arg0: i32) -> (i32, i32) {
    %c0_i32 = arith.constant 0 : i32
    %c0_i32_0 = arith.constant 0 : i32
    return %arg0, %c0_i32 : i32, i32
  }
  func.func @transform_1(%arg0: i32) -> (i32, i32) {
    %c0_i32 = arith.constant 0 : i32
    %c0_i32_0 = arith.constant 0 : i32
    %c0_i32_1 = arith.constant 0 : i32
    return %c0_i32, %c0_i32_0 : i32, i32
  }
  func.func @transform_2(%arg0: i32) -> (i32, i32) {
    %c0_i32 = arith.constant 0 : i32
    %c0_i32_0 = arith.constant 0 : i32
    %c0_i32_1 = arith.constant 0 : i32
    return %c0_i32, %c0_i32_0 : i32, i32
  }
  func.func @transform_3(%arg0: i32) -> (i32, i32) {
    %c0_i32 = arith.constant 0 : i32
    %c0_i32_0 = arith.constant 0 : i32
    %c0_i32_1 = arith.constant 0 : i32
    return %c0_i32, %c0_i32_0 : i32, i32
  }
  func.func @transform_4(%arg0: i32) -> (i32, i32) {
    %c0_i32 = arith.constant 0 : i32
    %c0_i32_0 = arith.constant 0 : i32
    %c0_i32_1 = arith.constant 0 : i32
    return %c0_i32, %c0_i32_0 : i32, i32
  }
  func.func @transform_5(%arg0: i32) -> (i32, i32, i32) {
    %c0_i32 = arith.constant 0 : i32
    %c0_i32_0 = arith.constant 0 : i32
    %c0_i32_1 = arith.constant 0 : i32
    return %c0_i32, %arg0, %c0_i32_0 : i32, i32, i32
  }
}

module attributes {stable_mosaic.version = 11 : i64} {
  func.func @gru_chunk_kernel(%arg0: i32, %arg1: i32, %arg2: memref<1x8x2x96xbf16, #tpu.memory_space<vmem>>, %arg3: memref<1x32x96xbf16, #tpu.memory_space<vmem>>, %arg4: memref<1x1x96xf32, #tpu.memory_space<vmem>>, %arg5: memref<1x2x32xf32, #tpu.memory_space<vmem>>, %arg6: memref<1x8x2x32xbf16, #tpu.memory_space<vmem>>, %arg7: memref<1x2x32xf32, #tpu.memory_space<vmem>>, %arg8: memref<2x32xf32, #tpu.memory_space<vmem>>) attributes {dimension_semantics = [#tpu.dimension_semantics<parallel>, #tpu.dimension_semantics<arbitrary>], iteration_bounds = array<i64: 2, 1>, scalar_prefetch = 0 : i64, scratch_operands = 1 : i64, tpu.core_type = #tpu.core_type<tc>, window_params = [{transform_indices = @transform_0, window_bounds = array<i64: 1, 8, 2, 96>}, {transform_indices = @transform_1, window_bounds = array<i64: 1, 32, 96>}, {transform_indices = @transform_2, window_bounds = array<i64: 1, 1, 96>}, {transform_indices = @transform_3, window_bounds = array<i64: 1, 2, 32>}, {transform_indices = @transform_4, window_bounds = array<i64: 1, 8, 2, 32>}, {transform_indices = @transform_5, window_bounds = array<i64: 1, 2, 32>}]} {
    %c0_i32 = arith.constant 0 : i32
    %0 = arith.cmpi eq, %arg0, %c0_i32 : i32
    %c0_i32_0 = arith.constant 0 : i32
    %1 = arith.cmpi eq, %arg1, %c0_i32_0 : i32
    %2 = arith.extui %1 : i1 to i32
    %c0_i32_1 = arith.constant 0 : i32
    %3 = arith.cmpi ne, %2, %c0_i32_1 : i32
    scf.if %3 {
      %c0_101 = arith.constant 0 : index
      %c0_102 = arith.constant 0 : index
      %c0_103 = arith.constant 0 : index
      %341 = vector.load %arg5[%c0_101, %c0_102, %c0_103] : memref<1x2x32xf32, #tpu.memory_space<vmem>>, vector<1x2x32xf32>
      %342 = vector.shape_cast %341 : vector<1x2x32xf32> to vector<2x32xf32>
      %c0_104 = arith.constant 0 : index
      %c0_105 = arith.constant 0 : index
      %343 = vector.load %arg8[%c0_104, %c0_105] : memref<2x32xf32, #tpu.memory_space<vmem>>, vector<2x32xf32>
      tpu.vector_store %arg8[%c0_104, %c0_105], %342 {strides = array<i32>} : memref<2x32xf32, #tpu.memory_space<vmem>>, vector<2x32xf32>,
    } else {
    }
    %c0 = arith.constant 0 : index
    %c0_2 = arith.constant 0 : index
    %c0_3 = arith.constant 0 : index
    %4 = vector.load %arg3[%c0, %c0_2, %c0_3] : memref<1x32x96xbf16, #tpu.memory_space<vmem>>, vector<1x32x96xbf16>
    %5 = vector.shape_cast %4 : vector<1x32x96xbf16> to vector<32x96xbf16>
    %c0_4 = arith.constant 0 : index
    %c0_5 = arith.constant 0 : index
    %c0_6 = arith.constant 0 : index
    %6 = vector.load %arg4[%c0_4, %c0_5, %c0_6] : memref<1x1x96xf32, #tpu.memory_space<vmem>>, vector<1x1x96xf32>
    %7 = vector.shape_cast %6 : vector<1x1x96xf32> to vector<1x96xf32>
    %c0_7 = arith.constant 0 : index
    %c0_8 = arith.constant 0 : index
    %8 = vector.load %arg8[%c0_7, %c0_8] : memref<2x32xf32, #tpu.memory_space<vmem>>, vector<2x32xf32>
    %c0_i32_9 = arith.constant 0 : i32
    %c7_i32 = arith.constant 7 : i32
    %9 = arith.subi %c7_i32, %c0_i32_9 : i32
    %10 = arith.select %0, %c0_i32_9, %9 : i32
    %c0_10 = arith.constant 0 : index
    %11 = arith.index_cast %10 : i32 to index
    %c0_11 = arith.constant 0 : index
    %c0_12 = arith.constant 0 : index
    %12 = vector.load %arg2[%c0_10, %11, %c0_11, %c0_12] : memref<1x8x2x96xbf16, #tpu.memory_space<vmem>>, vector<1x1x2x96xbf16>
    %13 = vector.shape_cast %12 : vector<1x1x2x96xbf16> to vector<2x96xbf16>
    %14 = arith.extf %13 : vector<2x96xbf16> to vector<2x96xf32>
    %15 = arith.truncf %8 : vector<2x32xf32> to vector<2x32xbf16>
    %cst = arith.constant dense<0.000000e+00> : vector<2x96xf32>
    %16 = tpu.matmul %15, %5, %cst {dimension_numbers = #tpu.dot_dimension_numbers<[1], [0], [0], [1], [0, 0, 1, 1], [], []>} : vector<2x32xbf16>, vector<32x96xbf16>, vector<2x96xf32> -> vector<2x96xf32>
    %17 = vector.broadcast %7 : vector<1x96xf32> to vector<2x96xf32>
    %18 = arith.addf %16, %17 : vector<2x96xf32>
    %19 = vector.extract_strided_slice %14 {offsets = [0, 0], sizes = [2, 32], strides = [1, 1]} : vector<2x96xf32> to vector<2x32xf32>
    %20 = vector.extract_strided_slice %18 {offsets = [0, 0], sizes = [2, 32], strides = [1, 1]} : vector<2x96xf32> to vector<2x32xf32>
    %21 = arith.addf %19, %20 : vector<2x32xf32>
    %22 = arith.negf %21 : vector<2x32xf32>
    %23 = math.exp %22 : vector<2x32xf32>
    %cst_13 = arith.constant 1.000000e+00 : f32
    %24 = vector.broadcast %cst_13 : f32 to vector<2x32xf32>
    %25 = arith.addf %24, %23 : vector<2x32xf32>
    %26 = arith.divf %24, %25 : vector<2x32xf32>
    %27 = vector.extract_strided_slice %14 {offsets = [0, 32], sizes = [2, 32], strides = [1, 1]} : vector<2x96xf32> to vector<2x32xf32>
    %28 = vector.extract_strided_slice %18 {offsets = [0, 32], sizes = [2, 32], strides = [1, 1]} : vector<2x96xf32> to vector<2x32xf32>
    %29 = arith.addf %27, %28 : vector<2x32xf32>
    %30 = arith.negf %29 : vector<2x32xf32>
    %31 = math.exp %30 : vector<2x32xf32>
    %cst_14 = arith.constant 1.000000e+00 : f32
    %32 = vector.broadcast %cst_14 : f32 to vector<2x32xf32>
    %33 = arith.addf %32, %31 : vector<2x32xf32>
    %34 = arith.divf %32, %33 : vector<2x32xf32>
    %35 = vector.extract_strided_slice %14 {offsets = [0, 64], sizes = [2, 32], strides = [1, 1]} : vector<2x96xf32> to vector<2x32xf32>
    %36 = vector.extract_strided_slice %18 {offsets = [0, 64], sizes = [2, 32], strides = [1, 1]} : vector<2x96xf32> to vector<2x32xf32>
    %37 = arith.mulf %26, %36 : vector<2x32xf32>
    %38 = arith.addf %35, %37 : vector<2x32xf32>
    %39 = math.tanh %38 : vector<2x32xf32>
    %cst_15 = arith.constant 1.000000e+00 : f32
    %40 = vector.broadcast %cst_15 : f32 to vector<2x32xf32>
    %41 = arith.subf %40, %34 : vector<2x32xf32>
    %42 = arith.mulf %41, %39 : vector<2x32xf32>
    %43 = arith.mulf %34, %8 : vector<2x32xf32>
    %44 = arith.addf %42, %43 : vector<2x32xf32>
    %45 = arith.truncf %44 : vector<2x32xf32> to vector<2x32xbf16>
    %c0_16 = arith.constant 0 : index
    %46 = arith.index_cast %10 : i32 to index
    %c0_17 = arith.constant 0 : index
    %c0_18 = arith.constant 0 : index
    %47 = vector.load %arg6[%c0_16, %46, %c0_17, %c0_18] : memref<1x8x2x32xbf16, #tpu.memory_space<vmem>>, vector<1x1x2x32xbf16>
    %48 = vector.shape_cast %47 : vector<1x1x2x32xbf16> to vector<2x32xbf16>
    %49 = vector.shape_cast %45 : vector<2x32xbf16> to vector<1x1x2x32xbf16>
    tpu.vector_store %arg6[%c0_16, %46, %c0_17, %c0_18], %49 {strides = array<i32>} : memref<1x8x2x32xbf16, #tpu.memory_space<vmem>>, vector<1x1x2x32xbf16>,
    %c1_i32 = arith.constant 1 : i32
    %c7_i32_19 = arith.constant 7 : i32
    %50 = arith.subi %c7_i32_19, %c1_i32 : i32
    %51 = arith.select %0, %c1_i32, %50 : i32
    %c0_20 = arith.constant 0 : index
    %52 = arith.index_cast %51 : i32 to index
    %c0_21 = arith.constant 0 : index
    %c0_22 = arith.constant 0 : index
    %53 = vector.load %arg2[%c0_20, %52, %c0_21, %c0_22] : memref<1x8x2x96xbf16, #tpu.memory_space<vmem>>, vector<1x1x2x96xbf16>
    %54 = vector.shape_cast %53 : vector<1x1x2x96xbf16> to vector<2x96xbf16>
    %55 = arith.extf %54 : vector<2x96xbf16> to vector<2x96xf32>
    %56 = arith.truncf %44 : vector<2x32xf32> to vector<2x32xbf16>
    %cst_23 = arith.constant dense<0.000000e+00> : vector<2x96xf32>
    %57 = tpu.matmul %56, %5, %cst_23 {dimension_numbers = #tpu.dot_dimension_numbers<[1], [0], [0], [1], [0, 0, 1, 1], [], []>} : vector<2x32xbf16>, vector<32x96xbf16>, vector<2x96xf32> -> vector<2x96xf32>
    %58 = vector.broadcast %7 : vector<1x96xf32> to vector<2x96xf32>
    %59 = arith.addf %57, %58 : vector<2x96xf32>
    %60 = vector.extract_strided_slice %55 {offsets = [0, 0], sizes = [2, 32], strides = [1, 1]} : vector<2x96xf32> to vector<2x32xf32>
    %61 = vector.extract_strided_slice %59 {offsets = [0, 0], sizes = [2, 32], strides = [1, 1]} : vector<2x96xf32> to vector<2x32xf32>
    %62 = arith.addf %60, %61 : vector<2x32xf32>
    %63 = arith.negf %62 : vector<2x32xf32>
    %64 = math.exp %63 : vector<2x32xf32>
    %cst_24 = arith.constant 1.000000e+00 : f32
    %65 = vector.broadcast %cst_24 : f32 to vector<2x32xf32>
    %66 = arith.addf %65, %64 : vector<2x32xf32>
    %67 = arith.divf %65, %66 : vector<2x32xf32>
    %68 = vector.extract_strided_slice %55 {offsets = [0, 32], sizes = [2, 32], strides = [1, 1]} : vector<2x96xf32> to vector<2x32xf32>
    %69 = vector.extract_strided_slice %59 {offsets = [0, 32], sizes = [2, 32], strides = [1, 1]} : vector<2x96xf32> to vector<2x32xf32>
    %70 = arith.addf %68, %69 : vector<2x32xf32>
    %71 = arith.negf %70 : vector<2x32xf32>
    %72 = math.exp %71 : vector<2x32xf32>
    %cst_25 = arith.constant 1.000000e+00 : f32
    %73 = vector.broadcast %cst_25 : f32 to vector<2x32xf32>
    %74 = arith.addf %73, %72 : vector<2x32xf32>
    %75 = arith.divf %73, %74 : vector<2x32xf32>
    %76 = vector.extract_strided_slice %55 {offsets = [0, 64], sizes = [2, 32], strides = [1, 1]} : vector<2x96xf32> to vector<2x32xf32>
    %77 = vector.extract_strided_slice %59 {offsets = [0, 64], sizes = [2, 32], strides = [1, 1]} : vector<2x96xf32> to vector<2x32xf32>
    %78 = arith.mulf %67, %77 : vector<2x32xf32>
    %79 = arith.addf %76, %78 : vector<2x32xf32>
    %80 = math.tanh %79 : vector<2x32xf32>
    %cst_26 = arith.constant 1.000000e+00 : f32
    %81 = vector.broadcast %cst_26 : f32 to vector<2x32xf32>
    %82 = arith.subf %81, %75 : vector<2x32xf32>
    %83 = arith.mulf %82, %80 : vector<2x32xf32>
    %84 = arith.mulf %75, %44 : vector<2x32xf32>
    %85 = arith.addf %83, %84 : vector<2x32xf32>
    %86 = arith.truncf %85 : vector<2x32xf32> to vector<2x32xbf16>
    %c0_27 = arith.constant 0 : index
    %87 = arith.index_cast %51 : i32 to index
    %c0_28 = arith.constant 0 : index
    %c0_29 = arith.constant 0 : index
    %88 = vector.load %arg6[%c0_27, %87, %c0_28, %c0_29] : memref<1x8x2x32xbf16, #tpu.memory_space<vmem>>, vector<1x1x2x32xbf16>
    %89 = vector.shape_cast %88 : vector<1x1x2x32xbf16> to vector<2x32xbf16>
    %90 = vector.shape_cast %86 : vector<2x32xbf16> to vector<1x1x2x32xbf16>
    tpu.vector_store %arg6[%c0_27, %87, %c0_28, %c0_29], %90 {strides = array<i32>} : memref<1x8x2x32xbf16, #tpu.memory_space<vmem>>, vector<1x1x2x32xbf16>,
    %c2_i32 = arith.constant 2 : i32
    %c7_i32_30 = arith.constant 7 : i32
    %91 = arith.subi %c7_i32_30, %c2_i32 : i32
    %92 = arith.select %0, %c2_i32, %91 : i32
    %c0_31 = arith.constant 0 : index
    %93 = arith.index_cast %92 : i32 to index
    %c0_32 = arith.constant 0 : index
    %c0_33 = arith.constant 0 : index
    %94 = vector.load %arg2[%c0_31, %93, %c0_32, %c0_33] : memref<1x8x2x96xbf16, #tpu.memory_space<vmem>>, vector<1x1x2x96xbf16>
    %95 = vector.shape_cast %94 : vector<1x1x2x96xbf16> to vector<2x96xbf16>
    %96 = arith.extf %95 : vector<2x96xbf16> to vector<2x96xf32>
    %97 = arith.truncf %85 : vector<2x32xf32> to vector<2x32xbf16>
    %cst_34 = arith.constant dense<0.000000e+00> : vector<2x96xf32>
    %98 = tpu.matmul %97, %5, %cst_34 {dimension_numbers = #tpu.dot_dimension_numbers<[1], [0], [0], [1], [0, 0, 1, 1], [], []>} : vector<2x32xbf16>, vector<32x96xbf16>, vector<2x96xf32> -> vector<2x96xf32>
    %99 = vector.broadcast %7 : vector<1x96xf32> to vector<2x96xf32>
    %100 = arith.addf %98, %99 : vector<2x96xf32>
    %101 = vector.extract_strided_slice %96 {offsets = [0, 0], sizes = [2, 32], strides = [1, 1]} : vector<2x96xf32> to vector<2x32xf32>
    %102 = vector.extract_strided_slice %100 {offsets = [0, 0], sizes = [2, 32], strides = [1, 1]} : vector<2x96xf32> to vector<2x32xf32>
    %103 = arith.addf %101, %102 : vector<2x32xf32>
    %104 = arith.negf %103 : vector<2x32xf32>
    %105 = math.exp %104 : vector<2x32xf32>
    %cst_35 = arith.constant 1.000000e+00 : f32
    %106 = vector.broadcast %cst_35 : f32 to vector<2x32xf32>
    %107 = arith.addf %106, %105 : vector<2x32xf32>
    %108 = arith.divf %106, %107 : vector<2x32xf32>
    %109 = vector.extract_strided_slice %96 {offsets = [0, 32], sizes = [2, 32], strides = [1, 1]} : vector<2x96xf32> to vector<2x32xf32>
    %110 = vector.extract_strided_slice %100 {offsets = [0, 32], sizes = [2, 32], strides = [1, 1]} : vector<2x96xf32> to vector<2x32xf32>
    %111 = arith.addf %109, %110 : vector<2x32xf32>
    %112 = arith.negf %111 : vector<2x32xf32>
    %113 = math.exp %112 : vector<2x32xf32>
    %cst_36 = arith.constant 1.000000e+00 : f32
    %114 = vector.broadcast %cst_36 : f32 to vector<2x32xf32>
    %115 = arith.addf %114, %113 : vector<2x32xf32>
    %116 = arith.divf %114, %115 : vector<2x32xf32>
    %117 = vector.extract_strided_slice %96 {offsets = [0, 64], sizes = [2, 32], strides = [1, 1]} : vector<2x96xf32> to vector<2x32xf32>
    %118 = vector.extract_strided_slice %100 {offsets = [0, 64], sizes = [2, 32], strides = [1, 1]} : vector<2x96xf32> to vector<2x32xf32>
    %119 = arith.mulf %108, %118 : vector<2x32xf32>
    %120 = arith.addf %117, %119 : vector<2x32xf32>
    %121 = math.tanh %120 : vector<2x32xf32>
    %cst_37 = arith.constant 1.000000e+00 : f32
    %122 = vector.broadcast %cst_37 : f32 to vector<2x32xf32>
    %123 = arith.subf %122, %116 : vector<2x32xf32>
    %124 = arith.mulf %123, %121 : vector<2x32xf32>
    %125 = arith.mulf %116, %85 : vector<2x32xf32>
    %126 = arith.addf %124, %125 : vector<2x32xf32>
    %127 = arith.truncf %126 : vector<2x32xf32> to vector<2x32xbf16>
    %c0_38 = arith.constant 0 : index
    %128 = arith.index_cast %92 : i32 to index
    %c0_39 = arith.constant 0 : index
    %c0_40 = arith.constant 0 : index
    %129 = vector.load %arg6[%c0_38, %128, %c0_39, %c0_40] : memref<1x8x2x32xbf16, #tpu.memory_space<vmem>>, vector<1x1x2x32xbf16>
    %130 = vector.shape_cast %129 : vector<1x1x2x32xbf16> to vector<2x32xbf16>
    %131 = vector.shape_cast %127 : vector<2x32xbf16> to vector<1x1x2x32xbf16>
    tpu.vector_store %arg6[%c0_38, %128, %c0_39, %c0_40], %131 {strides = array<i32>} : memref<1x8x2x32xbf16, #tpu.memory_space<vmem>>, vector<1x1x2x32xbf16>,
    %c3_i32 = arith.constant 3 : i32
    %c7_i32_41 = arith.constant 7 : i32
    %132 = arith.subi %c7_i32_41, %c3_i32 : i32
    %133 = arith.select %0, %c3_i32, %132 : i32
    %c0_42 = arith.constant 0 : index
    %134 = arith.index_cast %133 : i32 to index
    %c0_43 = arith.constant 0 : index
    %c0_44 = arith.constant 0 : index
    %135 = vector.load %arg2[%c0_42, %134, %c0_43, %c0_44] : memref<1x8x2x96xbf16, #tpu.memory_space<vmem>>, vector<1x1x2x96xbf16>
    %136 = vector.shape_cast %135 : vector<1x1x2x96xbf16> to vector<2x96xbf16>
    %137 = arith.extf %136 : vector<2x96xbf16> to vector<2x96xf32>
    %138 = arith.truncf %126 : vector<2x32xf32> to vector<2x32xbf16>
    %cst_45 = arith.constant dense<0.000000e+00> : vector<2x96xf32>
    %139 = tpu.matmul %138, %5, %cst_45 {dimension_numbers = #tpu.dot_dimension_numbers<[1], [0], [0], [1], [0, 0, 1, 1], [], []>} : vector<2x32xbf16>, vector<32x96xbf16>, vector<2x96xf32> -> vector<2x96xf32>
    %140 = vector.broadcast %7 : vector<1x96xf32> to vector<2x96xf32>
    %141 = arith.addf %139, %140 : vector<2x96xf32>
    %142 = vector.extract_strided_slice %137 {offsets = [0, 0], sizes = [2, 32], strides = [1, 1]} : vector<2x96xf32> to vector<2x32xf32>
    %143 = vector.extract_strided_slice %141 {offsets = [0, 0], sizes = [2, 32], strides = [1, 1]} : vector<2x96xf32> to vector<2x32xf32>
    %144 = arith.addf %142, %143 : vector<2x32xf32>
    %145 = arith.negf %144 : vector<2x32xf32>
    %146 = math.exp %145 : vector<2x32xf32>
    %cst_46 = arith.constant 1.000000e+00 : f32
    %147 = vector.broadcast %cst_46 : f32 to vector<2x32xf32>
    %148 = arith.addf %147, %146 : vector<2x32xf32>
    %149 = arith.divf %147, %148 : vector<2x32xf32>
    %150 = vector.extract_strided_slice %137 {offsets = [0, 32], sizes = [2, 32], strides = [1, 1]} : vector<2x96xf32> to vector<2x32xf32>
    %151 = vector.extract_strided_slice %141 {offsets = [0, 32], sizes = [2, 32], strides = [1, 1]} : vector<2x96xf32> to vector<2x32xf32>
    %152 = arith.addf %150, %151 : vector<2x32xf32>
    %153 = arith.negf %152 : vector<2x32xf32>
    %154 = math.exp %153 : vector<2x32xf32>
    %cst_47 = arith.constant 1.000000e+00 : f32
    %155 = vector.broadcast %cst_47 : f32 to vector<2x32xf32>
    %156 = arith.addf %155, %154 : vector<2x32xf32>
    %157 = arith.divf %155, %156 : vector<2x32xf32>
    %158 = vector.extract_strided_slice %137 {offsets = [0, 64], sizes = [2, 32], strides = [1, 1]} : vector<2x96xf32> to vector<2x32xf32>
    %159 = vector.extract_strided_slice %141 {offsets = [0, 64], sizes = [2, 32], strides = [1, 1]} : vector<2x96xf32> to vector<2x32xf32>
    %160 = arith.mulf %149, %159 : vector<2x32xf32>
    %161 = arith.addf %158, %160 : vector<2x32xf32>
    %162 = math.tanh %161 : vector<2x32xf32>
    %cst_48 = arith.constant 1.000000e+00 : f32
    %163 = vector.broadcast %cst_48 : f32 to vector<2x32xf32>
    %164 = arith.subf %163, %157 : vector<2x32xf32>
    %165 = arith.mulf %164, %162 : vector<2x32xf32>
    %166 = arith.mulf %157, %126 : vector<2x32xf32>
    %167 = arith.addf %165, %166 : vector<2x32xf32>
    %168 = arith.truncf %167 : vector<2x32xf32> to vector<2x32xbf16>
    %c0_49 = arith.constant 0 : index
    %169 = arith.index_cast %133 : i32 to index
    %c0_50 = arith.constant 0 : index
    %c0_51 = arith.constant 0 : index
    %170 = vector.load %arg6[%c0_49, %169, %c0_50, %c0_51] : memref<1x8x2x32xbf16, #tpu.memory_space<vmem>>, vector<1x1x2x32xbf16>
    %171 = vector.shape_cast %170 : vector<1x1x2x32xbf16> to vector<2x32xbf16>
    %172 = vector.shape_cast %168 : vector<2x32xbf16> to vector<1x1x2x32xbf16>
    tpu.vector_store %arg6[%c0_49, %169, %c0_50, %c0_51], %172 {strides = array<i32>} : memref<1x8x2x32xbf16, #tpu.memory_space<vmem>>, vector<1x1x2x32xbf16>,
    %c4_i32 = arith.constant 4 : i32
    %c7_i32_52 = arith.constant 7 : i32
    %173 = arith.subi %c7_i32_52, %c4_i32 : i32
    %174 = arith.select %0, %c4_i32, %173 : i32
    %c0_53 = arith.constant 0 : index
    %175 = arith.index_cast %174 : i32 to index
    %c0_54 = arith.constant 0 : index
    %c0_55 = arith.constant 0 : index
    %176 = vector.load %arg2[%c0_53, %175, %c0_54, %c0_55] : memref<1x8x2x96xbf16, #tpu.memory_space<vmem>>, vector<1x1x2x96xbf16>
    %177 = vector.shape_cast %176 : vector<1x1x2x96xbf16> to vector<2x96xbf16>
    %178 = arith.extf %177 : vector<2x96xbf16> to vector<2x96xf32>
    %179 = arith.truncf %167 : vector<2x32xf32> to vector<2x32xbf16>
    %cst_56 = arith.constant dense<0.000000e+00> : vector<2x96xf32>
    %180 = tpu.matmul %179, %5, %cst_56 {dimension_numbers = #tpu.dot_dimension_numbers<[1], [0], [0], [1], [0, 0, 1, 1], [], []>} : vector<2x32xbf16>, vector<32x96xbf16>, vector<2x96xf32> -> vector<2x96xf32>
    %181 = vector.broadcast %7 : vector<1x96xf32> to vector<2x96xf32>
    %182 = arith.addf %180, %181 : vector<2x96xf32>
    %183 = vector.extract_strided_slice %178 {offsets = [0, 0], sizes = [2, 32], strides = [1, 1]} : vector<2x96xf32> to vector<2x32xf32>
    %184 = vector.extract_strided_slice %182 {offsets = [0, 0], sizes = [2, 32], strides = [1, 1]} : vector<2x96xf32> to vector<2x32xf32>
    %185 = arith.addf %183, %184 : vector<2x32xf32>
    %186 = arith.negf %185 : vector<2x32xf32>
    %187 = math.exp %186 : vector<2x32xf32>
    %cst_57 = arith.constant 1.000000e+00 : f32
    %188 = vector.broadcast %cst_57 : f32 to vector<2x32xf32>
    %189 = arith.addf %188, %187 : vector<2x32xf32>
    %190 = arith.divf %188, %189 : vector<2x32xf32>
    %191 = vector.extract_strided_slice %178 {offsets = [0, 32], sizes = [2, 32], strides = [1, 1]} : vector<2x96xf32> to vector<2x32xf32>
    %192 = vector.extract_strided_slice %182 {offsets = [0, 32], sizes = [2, 32], strides = [1, 1]} : vector<2x96xf32> to vector<2x32xf32>
    %193 = arith.addf %191, %192 : vector<2x32xf32>
    %194 = arith.negf %193 : vector<2x32xf32>
    %195 = math.exp %194 : vector<2x32xf32>
    %cst_58 = arith.constant 1.000000e+00 : f32
    %196 = vector.broadcast %cst_58 : f32 to vector<2x32xf32>
    %197 = arith.addf %196, %195 : vector<2x32xf32>
    %198 = arith.divf %196, %197 : vector<2x32xf32>
    %199 = vector.extract_strided_slice %178 {offsets = [0, 64], sizes = [2, 32], strides = [1, 1]} : vector<2x96xf32> to vector<2x32xf32>
    %200 = vector.extract_strided_slice %182 {offsets = [0, 64], sizes = [2, 32], strides = [1, 1]} : vector<2x96xf32> to vector<2x32xf32>
    %201 = arith.mulf %190, %200 : vector<2x32xf32>
    %202 = arith.addf %199, %201 : vector<2x32xf32>
    %203 = math.tanh %202 : vector<2x32xf32>
    %cst_59 = arith.constant 1.000000e+00 : f32
    %204 = vector.broadcast %cst_59 : f32 to vector<2x32xf32>
    %205 = arith.subf %204, %198 : vector<2x32xf32>
    %206 = arith.mulf %205, %203 : vector<2x32xf32>
    %207 = arith.mulf %198, %167 : vector<2x32xf32>
    %208 = arith.addf %206, %207 : vector<2x32xf32>
    %209 = arith.truncf %208 : vector<2x32xf32> to vector<2x32xbf16>
    %c0_60 = arith.constant 0 : index
    %210 = arith.index_cast %174 : i32 to index
    %c0_61 = arith.constant 0 : index
    %c0_62 = arith.constant 0 : index
    %211 = vector.load %arg6[%c0_60, %210, %c0_61, %c0_62] : memref<1x8x2x32xbf16, #tpu.memory_space<vmem>>, vector<1x1x2x32xbf16>
    %212 = vector.shape_cast %211 : vector<1x1x2x32xbf16> to vector<2x32xbf16>
    %213 = vector.shape_cast %209 : vector<2x32xbf16> to vector<1x1x2x32xbf16>
    tpu.vector_store %arg6[%c0_60, %210, %c0_61, %c0_62], %213 {strides = array<i32>} : memref<1x8x2x32xbf16, #tpu.memory_space<vmem>>, vector<1x1x2x32xbf16>,
    %c5_i32 = arith.constant 5 : i32
    %c7_i32_63 = arith.constant 7 : i32
    %214 = arith.subi %c7_i32_63, %c5_i32 : i32
    %215 = arith.select %0, %c5_i32, %214 : i32
    %c0_64 = arith.constant 0 : index
    %216 = arith.index_cast %215 : i32 to index
    %c0_65 = arith.constant 0 : index
    %c0_66 = arith.constant 0 : index
    %217 = vector.load %arg2[%c0_64, %216, %c0_65, %c0_66] : memref<1x8x2x96xbf16, #tpu.memory_space<vmem>>, vector<1x1x2x96xbf16>
    %218 = vector.shape_cast %217 : vector<1x1x2x96xbf16> to vector<2x96xbf16>
    %219 = arith.extf %218 : vector<2x96xbf16> to vector<2x96xf32>
    %220 = arith.truncf %208 : vector<2x32xf32> to vector<2x32xbf16>
    %cst_67 = arith.constant dense<0.000000e+00> : vector<2x96xf32>
    %221 = tpu.matmul %220, %5, %cst_67 {dimension_numbers = #tpu.dot_dimension_numbers<[1], [0], [0], [1], [0, 0, 1, 1], [], []>} : vector<2x32xbf16>, vector<32x96xbf16>, vector<2x96xf32> -> vector<2x96xf32>
    %222 = vector.broadcast %7 : vector<1x96xf32> to vector<2x96xf32>
    %223 = arith.addf %221, %222 : vector<2x96xf32>
    %224 = vector.extract_strided_slice %219 {offsets = [0, 0], sizes = [2, 32], strides = [1, 1]} : vector<2x96xf32> to vector<2x32xf32>
    %225 = vector.extract_strided_slice %223 {offsets = [0, 0], sizes = [2, 32], strides = [1, 1]} : vector<2x96xf32> to vector<2x32xf32>
    %226 = arith.addf %224, %225 : vector<2x32xf32>
    %227 = arith.negf %226 : vector<2x32xf32>
    %228 = math.exp %227 : vector<2x32xf32>
    %cst_68 = arith.constant 1.000000e+00 : f32
    %229 = vector.broadcast %cst_68 : f32 to vector<2x32xf32>
    %230 = arith.addf %229, %228 : vector<2x32xf32>
    %231 = arith.divf %229, %230 : vector<2x32xf32>
    %232 = vector.extract_strided_slice %219 {offsets = [0, 32], sizes = [2, 32], strides = [1, 1]} : vector<2x96xf32> to vector<2x32xf32>
    %233 = vector.extract_strided_slice %223 {offsets = [0, 32], sizes = [2, 32], strides = [1, 1]} : vector<2x96xf32> to vector<2x32xf32>
    %234 = arith.addf %232, %233 : vector<2x32xf32>
    %235 = arith.negf %234 : vector<2x32xf32>
    %236 = math.exp %235 : vector<2x32xf32>
    %cst_69 = arith.constant 1.000000e+00 : f32
    %237 = vector.broadcast %cst_69 : f32 to vector<2x32xf32>
    %238 = arith.addf %237, %236 : vector<2x32xf32>
    %239 = arith.divf %237, %238 : vector<2x32xf32>
    %240 = vector.extract_strided_slice %219 {offsets = [0, 64], sizes = [2, 32], strides = [1, 1]} : vector<2x96xf32> to vector<2x32xf32>
    %241 = vector.extract_strided_slice %223 {offsets = [0, 64], sizes = [2, 32], strides = [1, 1]} : vector<2x96xf32> to vector<2x32xf32>
    %242 = arith.mulf %231, %241 : vector<2x32xf32>
    %243 = arith.addf %240, %242 : vector<2x32xf32>
    %244 = math.tanh %243 : vector<2x32xf32>
    %cst_70 = arith.constant 1.000000e+00 : f32
    %245 = vector.broadcast %cst_70 : f32 to vector<2x32xf32>
    %246 = arith.subf %245, %239 : vector<2x32xf32>
    %247 = arith.mulf %246, %244 : vector<2x32xf32>
    %248 = arith.mulf %239, %208 : vector<2x32xf32>
    %249 = arith.addf %247, %248 : vector<2x32xf32>
    %250 = arith.truncf %249 : vector<2x32xf32> to vector<2x32xbf16>
    %c0_71 = arith.constant 0 : index
    %251 = arith.index_cast %215 : i32 to index
    %c0_72 = arith.constant 0 : index
    %c0_73 = arith.constant 0 : index
    %252 = vector.load %arg6[%c0_71, %251, %c0_72, %c0_73] : memref<1x8x2x32xbf16, #tpu.memory_space<vmem>>, vector<1x1x2x32xbf16>
    %253 = vector.shape_cast %252 : vector<1x1x2x32xbf16> to vector<2x32xbf16>
    %254 = vector.shape_cast %250 : vector<2x32xbf16> to vector<1x1x2x32xbf16>
    tpu.vector_store %arg6[%c0_71, %251, %c0_72, %c0_73], %254 {strides = array<i32>} : memref<1x8x2x32xbf16, #tpu.memory_space<vmem>>, vector<1x1x2x32xbf16>,
    %c6_i32 = arith.constant 6 : i32
    %c7_i32_74 = arith.constant 7 : i32
    %255 = arith.subi %c7_i32_74, %c6_i32 : i32
    %256 = arith.select %0, %c6_i32, %255 : i32
    %c0_75 = arith.constant 0 : index
    %257 = arith.index_cast %256 : i32 to index
    %c0_76 = arith.constant 0 : index
    %c0_77 = arith.constant 0 : index
    %258 = vector.load %arg2[%c0_75, %257, %c0_76, %c0_77] : memref<1x8x2x96xbf16, #tpu.memory_space<vmem>>, vector<1x1x2x96xbf16>
    %259 = vector.shape_cast %258 : vector<1x1x2x96xbf16> to vector<2x96xbf16>
    %260 = arith.extf %259 : vector<2x96xbf16> to vector<2x96xf32>
    %261 = arith.truncf %249 : vector<2x32xf32> to vector<2x32xbf16>
    %cst_78 = arith.constant dense<0.000000e+00> : vector<2x96xf32>
    %262 = tpu.matmul %261, %5, %cst_78 {dimension_numbers = #tpu.dot_dimension_numbers<[1], [0], [0], [1], [0, 0, 1, 1], [], []>} : vector<2x32xbf16>, vector<32x96xbf16>, vector<2x96xf32> -> vector<2x96xf32>
    %263 = vector.broadcast %7 : vector<1x96xf32> to vector<2x96xf32>
    %264 = arith.addf %262, %263 : vector<2x96xf32>
    %265 = vector.extract_strided_slice %260 {offsets = [0, 0], sizes = [2, 32], strides = [1, 1]} : vector<2x96xf32> to vector<2x32xf32>
    %266 = vector.extract_strided_slice %264 {offsets = [0, 0], sizes = [2, 32], strides = [1, 1]} : vector<2x96xf32> to vector<2x32xf32>
    %267 = arith.addf %265, %266 : vector<2x32xf32>
    %268 = arith.negf %267 : vector<2x32xf32>
    %269 = math.exp %268 : vector<2x32xf32>
    %cst_79 = arith.constant 1.000000e+00 : f32
    %270 = vector.broadcast %cst_79 : f32 to vector<2x32xf32>
    %271 = arith.addf %270, %269 : vector<2x32xf32>
    %272 = arith.divf %270, %271 : vector<2x32xf32>
    %273 = vector.extract_strided_slice %260 {offsets = [0, 32], sizes = [2, 32], strides = [1, 1]} : vector<2x96xf32> to vector<2x32xf32>
    %274 = vector.extract_strided_slice %264 {offsets = [0, 32], sizes = [2, 32], strides = [1, 1]} : vector<2x96xf32> to vector<2x32xf32>
    %275 = arith.addf %273, %274 : vector<2x32xf32>
    %276 = arith.negf %275 : vector<2x32xf32>
    %277 = math.exp %276 : vector<2x32xf32>
    %cst_80 = arith.constant 1.000000e+00 : f32
    %278 = vector.broadcast %cst_80 : f32 to vector<2x32xf32>
    %279 = arith.addf %278, %277 : vector<2x32xf32>
    %280 = arith.divf %278, %279 : vector<2x32xf32>
    %281 = vector.extract_strided_slice %260 {offsets = [0, 64], sizes = [2, 32], strides = [1, 1]} : vector<2x96xf32> to vector<2x32xf32>
    %282 = vector.extract_strided_slice %264 {offsets = [0, 64], sizes = [2, 32], strides = [1, 1]} : vector<2x96xf32> to vector<2x32xf32>
    %283 = arith.mulf %272, %282 : vector<2x32xf32>
    %284 = arith.addf %281, %283 : vector<2x32xf32>
    %285 = math.tanh %284 : vector<2x32xf32>
    %cst_81 = arith.constant 1.000000e+00 : f32
    %286 = vector.broadcast %cst_81 : f32 to vector<2x32xf32>
    %287 = arith.subf %286, %280 : vector<2x32xf32>
    %288 = arith.mulf %287, %285 : vector<2x32xf32>
    %289 = arith.mulf %280, %249 : vector<2x32xf32>
    %290 = arith.addf %288, %289 : vector<2x32xf32>
    %291 = arith.truncf %290 : vector<2x32xf32> to vector<2x32xbf16>
    %c0_82 = arith.constant 0 : index
    %292 = arith.index_cast %256 : i32 to index
    %c0_83 = arith.constant 0 : index
    %c0_84 = arith.constant 0 : index
    %293 = vector.load %arg6[%c0_82, %292, %c0_83, %c0_84] : memref<1x8x2x32xbf16, #tpu.memory_space<vmem>>, vector<1x1x2x32xbf16>
    %294 = vector.shape_cast %293 : vector<1x1x2x32xbf16> to vector<2x32xbf16>
    %295 = vector.shape_cast %291 : vector<2x32xbf16> to vector<1x1x2x32xbf16>
    tpu.vector_store %arg6[%c0_82, %292, %c0_83, %c0_84], %295 {strides = array<i32>} : memref<1x8x2x32xbf16, #tpu.memory_space<vmem>>, vector<1x1x2x32xbf16>,
    %c7_i32_85 = arith.constant 7 : i32
    %c7_i32_86 = arith.constant 7 : i32
    %296 = arith.subi %c7_i32_86, %c7_i32_85 : i32
    %297 = arith.select %0, %c7_i32_85, %296 : i32
    %c0_87 = arith.constant 0 : index
    %298 = arith.index_cast %297 : i32 to index
    %c0_88 = arith.constant 0 : index
    %c0_89 = arith.constant 0 : index
    %299 = vector.load %arg2[%c0_87, %298, %c0_88, %c0_89] : memref<1x8x2x96xbf16, #tpu.memory_space<vmem>>, vector<1x1x2x96xbf16>
    %300 = vector.shape_cast %299 : vector<1x1x2x96xbf16> to vector<2x96xbf16>
    %301 = arith.extf %300 : vector<2x96xbf16> to vector<2x96xf32>
    %302 = arith.truncf %290 : vector<2x32xf32> to vector<2x32xbf16>
    %cst_90 = arith.constant dense<0.000000e+00> : vector<2x96xf32>
    %303 = tpu.matmul %302, %5, %cst_90 {dimension_numbers = #tpu.dot_dimension_numbers<[1], [0], [0], [1], [0, 0, 1, 1], [], []>} : vector<2x32xbf16>, vector<32x96xbf16>, vector<2x96xf32> -> vector<2x96xf32>
    %304 = vector.broadcast %7 : vector<1x96xf32> to vector<2x96xf32>
    %305 = arith.addf %303, %304 : vector<2x96xf32>
    %306 = vector.extract_strided_slice %301 {offsets = [0, 0], sizes = [2, 32], strides = [1, 1]} : vector<2x96xf32> to vector<2x32xf32>
    %307 = vector.extract_strided_slice %305 {offsets = [0, 0], sizes = [2, 32], strides = [1, 1]} : vector<2x96xf32> to vector<2x32xf32>
    %308 = arith.addf %306, %307 : vector<2x32xf32>
    %309 = arith.negf %308 : vector<2x32xf32>
    %310 = math.exp %309 : vector<2x32xf32>
    %cst_91 = arith.constant 1.000000e+00 : f32
    %311 = vector.broadcast %cst_91 : f32 to vector<2x32xf32>
    %312 = arith.addf %311, %310 : vector<2x32xf32>
    %313 = arith.divf %311, %312 : vector<2x32xf32>
    %314 = vector.extract_strided_slice %301 {offsets = [0, 32], sizes = [2, 32], strides = [1, 1]} : vector<2x96xf32> to vector<2x32xf32>
    %315 = vector.extract_strided_slice %305 {offsets = [0, 32], sizes = [2, 32], strides = [1, 1]} : vector<2x96xf32> to vector<2x32xf32>
    %316 = arith.addf %314, %315 : vector<2x32xf32>
    %317 = arith.negf %316 : vector<2x32xf32>
    %318 = math.exp %317 : vector<2x32xf32>
    %cst_92 = arith.constant 1.000000e+00 : f32
    %319 = vector.broadcast %cst_92 : f32 to vector<2x32xf32>
    %320 = arith.addf %319, %318 : vector<2x32xf32>
    %321 = arith.divf %319, %320 : vector<2x32xf32>
    %322 = vector.extract_strided_slice %301 {offsets = [0, 64], sizes = [2, 32], strides = [1, 1]} : vector<2x96xf32> to vector<2x32xf32>
    %323 = vector.extract_strided_slice %305 {offsets = [0, 64], sizes = [2, 32], strides = [1, 1]} : vector<2x96xf32> to vector<2x32xf32>
    %324 = arith.mulf %313, %323 : vector<2x32xf32>
    %325 = arith.addf %322, %324 : vector<2x32xf32>
    %326 = math.tanh %325 : vector<2x32xf32>
    %cst_93 = arith.constant 1.000000e+00 : f32
    %327 = vector.broadcast %cst_93 : f32 to vector<2x32xf32>
    %328 = arith.subf %327, %321 : vector<2x32xf32>
    %329 = arith.mulf %328, %326 : vector<2x32xf32>
    %330 = arith.mulf %321, %290 : vector<2x32xf32>
    %331 = arith.addf %329, %330 : vector<2x32xf32>
    %332 = arith.truncf %331 : vector<2x32xf32> to vector<2x32xbf16>
    %c0_94 = arith.constant 0 : index
    %333 = arith.index_cast %297 : i32 to index
    %c0_95 = arith.constant 0 : index
    %c0_96 = arith.constant 0 : index
    %334 = vector.load %arg6[%c0_94, %333, %c0_95, %c0_96] : memref<1x8x2x32xbf16, #tpu.memory_space<vmem>>, vector<1x1x2x32xbf16>
    %335 = vector.shape_cast %334 : vector<1x1x2x32xbf16> to vector<2x32xbf16>
    %336 = vector.shape_cast %332 : vector<2x32xbf16> to vector<1x1x2x32xbf16>
    tpu.vector_store %arg6[%c0_94, %333, %c0_95, %c0_96], %336 {strides = array<i32>} : memref<1x8x2x32xbf16, #tpu.memory_space<vmem>>, vector<1x1x2x32xbf16>,
    %c8_i32 = arith.constant 8 : i32
    %c0_97 = arith.constant 0 : index
    %c0_98 = arith.constant 0 : index
    %337 = vector.load %arg8[%c0_97, %c0_98] : memref<2x32xf32, #tpu.memory_space<vmem>>, vector<2x32xf32>
    tpu.vector_store %arg8[%c0_97, %c0_98], %331 {strides = array<i32>} : memref<2x32xf32, #tpu.memory_space<vmem>>, vector<2x32xf32>,
    %c0_i32_99 = arith.constant 0 : i32
    %338 = arith.cmpi eq, %arg1, %c0_i32_99 : i32
    %339 = arith.extui %338 : i1 to i32
    %c0_i32_100 = arith.constant 0 : i32
    %340 = arith.cmpi ne, %339, %c0_i32_100 : i32
    scf.if %340 {
      %c0_101 = arith.constant 0 : index
      %c0_102 = arith.constant 0 : index
      %c0_103 = arith.constant 0 : index
      %341 = vector.load %arg7[%c0_101, %c0_102, %c0_103] : memref<1x2x32xf32, #tpu.memory_space<vmem>>, vector<1x2x32xf32>
      %342 = vector.shape_cast %341 : vector<1x2x32xf32> to vector<2x32xf32>
      %343 = vector.shape_cast %331 : vector<2x32xf32> to vector<1x2x32xf32>
      tpu.vector_store %arg7[%c0_101, %c0_102, %c0_103], %343 {strides = array<i32>} : memref<1x2x32xf32, #tpu.memory_space<vmem>>, vector<1x2x32xf32>,
    } else {
    }
    return
  }
  func.func @transform_0(%arg0: i32, %arg1: i32) -> (i32, i32, i32, i32) {
    %c1_i32 = arith.constant 1 : i32
    %0 = arith.subi %c1_i32, %arg0 : i32
    %1 = arith.muli %0, %arg1 : i32
    %c0_i32 = arith.constant 0 : i32
    %2 = arith.subi %c0_i32, %arg1 : i32
    %3 = arith.muli %arg0, %2 : i32
    %4 = arith.addi %1, %3 : i32
    %c0_i32_0 = arith.constant 0 : i32
    %c0_i32_1 = arith.constant 0 : i32
    %c0_i32_2 = arith.constant 0 : i32
    return %arg0, %4, %c0_i32_0, %c0_i32_1 : i32, i32, i32, i32
  }
  func.func @transform_1(%arg0: i32, %arg1: i32) -> (i32, i32, i32) {
    %c0_i32 = arith.constant 0 : i32
    %c0_i32_0 = arith.constant 0 : i32
    %c0_i32_1 = arith.constant 0 : i32
    return %arg0, %c0_i32, %c0_i32_0 : i32, i32, i32
  }
  func.func @transform_2(%arg0: i32, %arg1: i32) -> (i32, i32, i32) {
    %c0_i32 = arith.constant 0 : i32
    %c0_i32_0 = arith.constant 0 : i32
    %c0_i32_1 = arith.constant 0 : i32
    return %arg0, %c0_i32, %c0_i32_0 : i32, i32, i32
  }
  func.func @transform_3(%arg0: i32, %arg1: i32) -> (i32, i32, i32) {
    %c0_i32 = arith.constant 0 : i32
    %c0_i32_0 = arith.constant 0 : i32
    %c0_i32_1 = arith.constant 0 : i32
    return %arg0, %c0_i32, %c0_i32_0 : i32, i32, i32
  }
  func.func @transform_4(%arg0: i32, %arg1: i32) -> (i32, i32, i32, i32) {
    %c1_i32 = arith.constant 1 : i32
    %0 = arith.subi %c1_i32, %arg0 : i32
    %1 = arith.muli %0, %arg1 : i32
    %c0_i32 = arith.constant 0 : i32
    %2 = arith.subi %c0_i32, %arg1 : i32
    %3 = arith.muli %arg0, %2 : i32
    %4 = arith.addi %1, %3 : i32
    %c0_i32_0 = arith.constant 0 : i32
    %c0_i32_1 = arith.constant 0 : i32
    %c0_i32_2 = arith.constant 0 : i32
    return %arg0, %4, %c0_i32_0, %c0_i32_1 : i32, i32, i32, i32
  }
  func.func @transform_5(%arg0: i32, %arg1: i32) -> (i32, i32, i32) {
    %c0_i32 = arith.constant 0 : i32
    %c0_i32_0 = arith.constant 0 : i32
    %c0_i32_1 = arith.constant 0 : i32
    return %arg0, %c0_i32, %c0_i32_0 : i32, i32, i32
  }
}

module attributes {stable_mosaic.version = 11 : i64} {
  func.func @attn_out_kernel(%arg0: i32, %arg1: memref<2x8x32xbf16, #tpu.memory_space<vmem>>, %arg2: memref<2x8x32xbf16, #tpu.memory_space<vmem>>, %arg3: memref<1x32xf32, #tpu.memory_space<vmem>>, %arg4: memref<1x32xf32, #tpu.memory_space<vmem>>, %arg5: memref<1x1xf32, #tpu.memory_space<vmem>>, %arg6: memref<32x128xbf16, #tpu.memory_space<vmem>>, %arg7: memref<32x128xbf16, #tpu.memory_space<vmem>>, %arg8: memref<1x128xf32, #tpu.memory_space<vmem>>, %arg9: memref<2x128xf32, #tpu.memory_space<vmem>>, %arg10: memref<2x128xf32, #tpu.memory_space<vmem>>) attributes {dimension_semantics = [#tpu.dimension_semantics<parallel>], iteration_bounds = array<i64: 1>, scalar_prefetch = 0 : i64, scratch_operands = 0 : i64, tpu.core_type = #tpu.core_type<tc>, window_params = [{transform_indices = @transform_0, window_bounds = array<i64: 2, 8, 32>}, {transform_indices = @transform_1, window_bounds = array<i64: 2, 8, 32>}, {pipeline_mode = #tpu.pipeline_mode<synchronous>, transform_indices = @transform_2, window_bounds = array<i64: 1, 32>}, {pipeline_mode = #tpu.pipeline_mode<synchronous>, transform_indices = @transform_3, window_bounds = array<i64: 1, 32>}, {pipeline_mode = #tpu.pipeline_mode<synchronous>, transform_indices = @transform_4, window_bounds = array<i64: 1, 1>}, {pipeline_mode = #tpu.pipeline_mode<synchronous>, transform_indices = @transform_5, window_bounds = array<i64: 32, 128>}, {pipeline_mode = #tpu.pipeline_mode<synchronous>, transform_indices = @transform_6, window_bounds = array<i64: 32, 128>}, {pipeline_mode = #tpu.pipeline_mode<synchronous>, transform_indices = @transform_7, window_bounds = array<i64: 1, 128>}, {transform_indices = @transform_8, window_bounds = array<i64: 2, 128>}, {transform_indices = @transform_9, window_bounds = array<i64: 2, 128>}]} {
    %c0 = arith.constant 0 : index
    %c0_0 = arith.constant 0 : index
    %c0_1 = arith.constant 0 : index
    %0 = vector.load %arg1[%c0, %c0_0, %c0_1] : memref<2x8x32xbf16, #tpu.memory_space<vmem>>, vector<2x8x32xbf16>
    %1 = arith.extf %0 : vector<2x8x32xbf16> to vector<2x8x32xf32>
    %c0_2 = arith.constant 0 : index
    %c0_3 = arith.constant 0 : index
    %c0_4 = arith.constant 0 : index
    %2 = vector.load %arg2[%c0_2, %c0_3, %c0_4] : memref<2x8x32xbf16, #tpu.memory_space<vmem>>, vector<2x8x32xbf16>
    %3 = arith.extf %2 : vector<2x8x32xbf16> to vector<2x8x32xf32>
    %c0_5 = arith.constant 0 : index
    %c0_6 = arith.constant 0 : index
    %4 = vector.load %arg3[%c0_5, %c0_6] : memref<1x32xf32, #tpu.memory_space<vmem>>, vector<1x32xf32>
    %5 = vector.shape_cast %4 : vector<1x32xf32> to vector<1x1x32xf32>
    %6 = vector.broadcast %5 : vector<1x1x32xf32> to vector<2x8x32xf32>
    %7 = arith.mulf %1, %6 : vector<2x8x32xf32>
    %cst = arith.constant dense<0.000000e+00> : vector<2x8xf32>
    %8 = vector.multi_reduction <add>, %7, %cst [2] : vector<2x8x32xf32> to vector<2x8xf32>
    %c0_7 = arith.constant 0 : index
    %c0_8 = arith.constant 0 : index
    %9 = vector.load %arg4[%c0_7, %c0_8] : memref<1x32xf32, #tpu.memory_space<vmem>>, vector<1x32xf32>
    %10 = vector.shape_cast %9 : vector<1x32xf32> to vector<1x1x32xf32>
    %11 = vector.broadcast %10 : vector<1x1x32xf32> to vector<2x8x32xf32>
    %12 = arith.mulf %3, %11 : vector<2x8x32xf32>
    %cst_9 = arith.constant dense<0.000000e+00> : vector<2x8xf32>
    %13 = vector.multi_reduction <add>, %12, %cst_9 [2] : vector<2x8x32xf32> to vector<2x8xf32>
    %14 = arith.addf %8, %13 : vector<2x8xf32>
    %c0_10 = arith.constant 0 : index
    %c0_11 = arith.constant 0 : index
    %15 = vector.load %arg5[%c0_10, %c0_11] : memref<1x1xf32, #tpu.memory_space<vmem>>, vector<1x1xf32>
    %16 = vector.broadcast %15 : vector<1x1xf32> to vector<2x8xf32>
    %17 = arith.addf %14, %16 : vector<2x8xf32>
    %18 = math.tanh %17 : vector<2x8xf32>
    %cst_12 = arith.constant -1.000000e+30 : f32
    %19 = vector.broadcast %cst_12 : f32 to vector<2x120xf32>
    %20 = tpu.concatenate %18, %19 in 1 : vector<2x8xf32>, vector<2x120xf32> -> vector<2x128xf32>
    %cst_13 = arith.constant dense<0xFF800000> : vector<2xf32>
    %21 = vector.multi_reduction <maximumf>, %20, %cst_13 [1] : vector<2x128xf32> to vector<2xf32>
    %22 = vector.shape_cast %21 : vector<2xf32> to vector<2x1xf32>
    %23 = vector.broadcast %22 : vector<2x1xf32> to vector<2x128xf32>
    %24 = arith.subf %20, %23 : vector<2x128xf32>
    %25 = math.exp %24 : vector<2x128xf32>
    %cst_14 = arith.constant dense<0.000000e+00> : vector<2xf32>
    %26 = vector.multi_reduction <add>, %25, %cst_14 [1] : vector<2x128xf32> to vector<2xf32>
    %27 = vector.shape_cast %26 : vector<2xf32> to vector<2x1xf32>
    %28 = tpu.reciprocal %27 {approx = true} : vector<2x1xf32> -> vector<2x1xf32>
    %29 = vector.broadcast %28 : vector<2x1xf32> to vector<2x128xf32>
    %30 = arith.mulf %25, %29 : vector<2x128xf32>
    %31 = vector.extract_strided_slice %30 {offsets = [0, 0], sizes = [2, 8], strides = [1, 1]} : vector<2x128xf32> to vector<2x8xf32>
    %32 = vector.shape_cast %31 : vector<2x8xf32> to vector<2x8x1xf32>
    %33 = vector.broadcast %32 : vector<2x8x1xf32> to vector<2x8x32xf32>
    %34 = arith.mulf %33, %1 : vector<2x8x32xf32>
    %cst_15 = arith.constant dense<0.000000e+00> : vector<2x32xf32>
    %35 = vector.multi_reduction <add>, %34, %cst_15 [1] : vector<2x8x32xf32> to vector<2x32xf32>
    %36 = vector.shape_cast %31 : vector<2x8xf32> to vector<2x8x1xf32>
    %37 = vector.broadcast %36 : vector<2x8x1xf32> to vector<2x8x32xf32>
    %38 = arith.mulf %37, %3 : vector<2x8x32xf32>
    %cst_16 = arith.constant dense<0.000000e+00> : vector<2x32xf32>
    %39 = vector.multi_reduction <add>, %38, %cst_16 [1] : vector<2x8x32xf32> to vector<2x32xf32>
    %40 = arith.truncf %35 : vector<2x32xf32> to vector<2x32xbf16>
    %c0_17 = arith.constant 0 : index
    %c0_18 = arith.constant 0 : index
    %41 = vector.load %arg6[%c0_17, %c0_18] : memref<32x128xbf16, #tpu.memory_space<vmem>>, vector<32x128xbf16>
    %cst_19 = arith.constant dense<0.000000e+00> : vector<2x128xf32>
    %42 = tpu.matmul %40, %41, %cst_19 {dimension_numbers = #tpu.dot_dimension_numbers<[1], [0], [0], [1], [0, 0, 1, 1], [], []>} : vector<2x32xbf16>, vector<32x128xbf16>, vector<2x128xf32> -> vector<2x128xf32>
    %43 = arith.truncf %39 : vector<2x32xf32> to vector<2x32xbf16>
    %c0_20 = arith.constant 0 : index
    %c0_21 = arith.constant 0 : index
    %44 = vector.load %arg7[%c0_20, %c0_21] : memref<32x128xbf16, #tpu.memory_space<vmem>>, vector<32x128xbf16>
    %cst_22 = arith.constant dense<0.000000e+00> : vector<2x128xf32>
    %45 = tpu.matmul %43, %44, %cst_22 {dimension_numbers = #tpu.dot_dimension_numbers<[1], [0], [0], [1], [0, 0, 1, 1], [], []>} : vector<2x32xbf16>, vector<32x128xbf16>, vector<2x128xf32> -> vector<2x128xf32>
    %46 = arith.addf %42, %45 : vector<2x128xf32>
    %c0_23 = arith.constant 0 : index
    %c0_24 = arith.constant 0 : index
    %47 = vector.load %arg8[%c0_23, %c0_24] : memref<1x128xf32, #tpu.memory_space<vmem>>, vector<1x128xf32>
    %48 = vector.broadcast %47 : vector<1x128xf32> to vector<2x128xf32>
    %49 = arith.addf %46, %48 : vector<2x128xf32>
    %c0_25 = arith.constant 0 : index
    %c0_26 = arith.constant 0 : index
    %50 = vector.load %arg9[%c0_25, %c0_26] : memref<2x128xf32, #tpu.memory_space<vmem>>, vector<2x128xf32>
    tpu.vector_store %arg9[%c0_25, %c0_26], %49 {strides = array<i32>} : memref<2x128xf32, #tpu.memory_space<vmem>>, vector<2x128xf32>,
    %c0_27 = arith.constant 0 : index
    %c0_28 = arith.constant 0 : index
    %51 = vector.load %arg10[%c0_27, %c0_28] : memref<2x128xf32, #tpu.memory_space<vmem>>, vector<2x128xf32>
    tpu.vector_store %arg10[%c0_27, %c0_28], %30 {strides = array<i32>} : memref<2x128xf32, #tpu.memory_space<vmem>>, vector<2x128xf32>,
    return
  }
  func.func @transform_0(%arg0: i32) -> (i32, i32, i32) {
    %c0_i32 = arith.constant 0 : i32
    %c0_i32_0 = arith.constant 0 : i32
    %c0_i32_1 = arith.constant 0 : i32
    return %arg0, %c0_i32, %c0_i32_0 : i32, i32, i32
  }
  func.func @transform_1(%arg0: i32) -> (i32, i32, i32) {
    %c0_i32 = arith.constant 0 : i32
    %c0_i32_0 = arith.constant 0 : i32
    %c0_i32_1 = arith.constant 0 : i32
    return %arg0, %c0_i32, %c0_i32_0 : i32, i32, i32
  }
  func.func @transform_2(%arg0: i32) -> (i32, i32) {
    %c0_i32 = arith.constant 0 : i32
    %c0_i32_0 = arith.constant 0 : i32
    %c0_i32_1 = arith.constant 0 : i32
    return %c0_i32, %c0_i32_0 : i32, i32
  }
  func.func @transform_3(%arg0: i32) -> (i32, i32) {
    %c0_i32 = arith.constant 0 : i32
    %c0_i32_0 = arith.constant 0 : i32
    %c0_i32_1 = arith.constant 0 : i32
    return %c0_i32, %c0_i32_0 : i32, i32
  }
  func.func @transform_4(%arg0: i32) -> (i32, i32) {
    %c0_i32 = arith.constant 0 : i32
    %c0_i32_0 = arith.constant 0 : i32
    %c0_i32_1 = arith.constant 0 : i32
    return %c0_i32, %c0_i32_0 : i32, i32
  }
  func.func @transform_5(%arg0: i32) -> (i32, i32) {
    %c0_i32 = arith.constant 0 : i32
    %c0_i32_0 = arith.constant 0 : i32
    %c0_i32_1 = arith.constant 0 : i32
    return %c0_i32, %c0_i32_0 : i32, i32
  }
  func.func @transform_6(%arg0: i32) -> (i32, i32) {
    %c0_i32 = arith.constant 0 : i32
    %c0_i32_0 = arith.constant 0 : i32
    %c0_i32_1 = arith.constant 0 : i32
    return %c0_i32, %c0_i32_0 : i32, i32
  }
  func.func @transform_7(%arg0: i32) -> (i32, i32) {
    %c0_i32 = arith.constant 0 : i32
    %c0_i32_0 = arith.constant 0 : i32
    %c0_i32_1 = arith.constant 0 : i32
    return %c0_i32, %c0_i32_0 : i32, i32
  }
  func.func @transform_8(%arg0: i32) -> (i32, i32) {
    %c0_i32 = arith.constant 0 : i32
    %c0_i32_0 = arith.constant 0 : i32
    return %arg0, %c0_i32 : i32, i32
  }
  func.func @transform_9(%arg0: i32) -> (i32, i32) {
    %c0_i32 = arith.constant 0 : i32
    %c0_i32_0 = arith.constant 0 : i32
    return %arg0, %c0_i32 : i32, i32
  }
}

</mosaic_0001>

<llo_original>
// kernel: basic_attn_forward.5
$region0: #{basic_attn_forward.5}
  #allocation0 [shape = 'u32[]', space=smem, size = 0x4, offset = 0x4, fixed_abs, tag = 'smem constant byte address 0x4 - core index']
  #allocation1 [shape = 'u32[144,128]{1,0:T(1,128)}', space=vmem, size = 0x12000, scoped, tag = 'internal scratch']
  #allocation2 [shape = 'f32[1,1]{1,0:T(1,128)S(1)}', space=vmem, size = 0x200, scoped, tag = 'scoped memory for basic_attn_forward.5']
  %s0 = inlined_call_operand.vmem [shape: bf16[2,8,32], index: 0, kind: input, shape index: {}]
  %s1 = inlined_call_operand.vmem [shape: bf16[2,8,32], index: 1, kind: input, shape index: {}]
  %s2 = inlined_call_operand.vmem [shape: f32[1,32], index: 2, kind: input, shape index: {}]
  %s3 = inlined_call_operand.vmem [shape: f32[1,32], index: 3, kind: input, shape index: {}]
  %s4 = inlined_call_operand.<no memory space> [shape: f32[1,1], index: 4, kind: input, shape index: {}]
  %s5 = inlined_call_operand.vmem [shape: bf16[32,128], index: 5, kind: input, shape index: {}]
  %s6 = inlined_call_operand.vmem [shape: bf16[32,128], index: 6, kind: input, shape index: {}]
  %s7 = inlined_call_operand.vmem [shape: f32[1,128], index: 7, kind: input, shape index: {}]
  %s8 = inlined_call_operand.hbm [shape: f32[2,128], index: 8, kind: output, shape index: {0}]
  %s9 = inlined_call_operand.hbm [shape: f32[2,128], index: 9, kind: output, shape index: {1}]
  %10 = xla_tuple %s8, %s9
  %s11 = sld [smem:[#allocation0]]
  $region50: #{basic_attn_forward.5} parent=0
    _
  %s13 = ssub.s32 1, %s11
  %s14 = scalar_select 0, %s13, %s11
  %v15 = vstv %s4
  %16 = vst [vmem:[#allocation2] sm:$0x1] %v15
  $region1: #{basic_attn_forward.5} parent=0
    #allocation3 [shape = 'u8[1024]{0}', space=vmem, size = 0x400, scoped, tag = 'output window, operand 0, single buffered']
    #allocation4 [shape = 's32[1]{0}', space=sflag, size = 0x4, scoped, tag = 'scoped memory for basic_attn_forward.5']
    #allocation5 [shape = 'u8[1024]{0}', space=vmem, size = 0x400, scoped, tag = 'output window, operand 1, single buffered']
    #allocation6 [shape = 's32[1]{0}', space=sflag, size = 0x4, scoped, tag = 'scoped memory for basic_attn_forward.5']
    %17 = vsyncpa [#allocation4], 0
    %18 = vsyncpa [#allocation6], 0
    // Predicated region
    $region2: #{basic_attn_forward.5} parent=1 // pred_check
      _
    $region3: #{basic_attn_forward.5} parent=1 // pred_check_branch
      %20 = sbr.rel (0) target = $region5
    $region4: #{basic_attn_forward.5} parent=1 // pred_region
      _
    $region5: #{basic_attn_forward.5} parent=1 // pred_fallthru
      _
    // Predicated region
    $region6: #{basic_attn_forward.5} parent=1 // pred_check
      _
    $region7: #{basic_attn_forward.5} parent=1 // pred_check_branch
      %22 = sbr.rel (0) target = $region9
    $region8: #{basic_attn_forward.5} parent=1 // pred_region
      _
    $region9: #{basic_attn_forward.5} parent=1 // pred_fallthru
      _
    // Predicated region
    $region10: #{basic_attn_forward.5} parent=1 // pred_check
      _
    $region11: #{basic_attn_forward.5} parent=1 // pred_check_branch
      %24 = sbr.rel (0) target = $region13
    $region12: #{basic_attn_forward.5} parent=1 // pred_region
      _
    $region13: #{basic_attn_forward.5} parent=1 // pred_fallthru
      _
    // Predicated region
    $region14: #{basic_attn_forward.5} parent=1 // pred_check
      _
    $region15: #{basic_attn_forward.5} parent=1 // pred_check_branch
      %26 = sbr.rel (0) target = $region17
    $region16: #{basic_attn_forward.5} parent=1 // pred_region
      _
    $region17: #{basic_attn_forward.5} parent=1 // pred_fallthru
      _
    // Predicated region
    $region18: #{basic_attn_forward.5} parent=1 // pred_check
      _
    $region19: #{basic_attn_forward.5} parent=1 // pred_check_branch
      %28 = sbr.rel (0) target = $region21
    $region20: #{basic_attn_forward.5} parent=1 // pred_region
      _
    $region21: #{basic_attn_forward.5} parent=1 // pred_fallthru
      _
    // Predicated region
    $region22: #{basic_attn_forward.5} parent=1 // pred_check
      _
    $region23: #{basic_attn_forward.5} parent=1 // pred_check_branch
      %30 = sbr.rel (0) target = $region25
    $region24: #{basic_attn_forward.5} parent=1 // pred_region
      _
    $region25: #{basic_attn_forward.5} parent=1 // pred_fallthru
      _
    // Predicated region
    $region26: #{basic_attn_forward.5} parent=1 // pred_check
      _
    $region27: #{basic_attn_forward.5} parent=1 // pred_check_branch
      %32 = sbr.rel (0) target = $region29
    $region28: #{basic_attn_forward.5} parent=1 // pred_region
      _
    $region29: #{basic_attn_forward.5} parent=1 // pred_fallthru
      _
    // Predicated region
    $region30: #{basic_attn_forward.5} parent=1 // pred_check
      _
    $region31: #{basic_attn_forward.5} parent=1 // pred_check_branch
      %34 = sbr.rel (0) target = $region33
    $region32: #{basic_attn_forward.5} parent=1 // pred_region
      _
    $region33: #{basic_attn_forward.5} parent=1 // pred_fallthru
      _
    %v36 = vld [vmem:[%s0] sm:$0xf]
    %v37 = vld [vmem:[%s0 + $0x4] sm:$0xf]
    %v38 = vunpack.c.l.bf16 %v36
    %v39 = vunpack.c.l.bf16 %v37
    %v40 = vld [vmem:[%s1] sm:$0xf]
    %v41 = vld [vmem:[%s1 + $0x4] sm:$0xf]
    %v42 = vunpack.c.l.bf16 %v40
    %v43 = vunpack.c.l.bf16 %v41
    %v44 = vld [vmem:[%s2] sm:$0x1]
    %v46 = vlaneseq
    %v47 = vshrl.u32 %v46, 7
    %v48 = vsub.s32 0, %v47
    %v49 = vrot.slane %v44, %v48
    %v51 = vmul.f32 %v38, %v49
    %v52 = vmul.f32 %v39, %v49
    %vm53 = vcmask 261120
    %v54 = vsel %vm53, %v51, 0.0
    %55 = vadd.xlane.f32.xlu0 %v54
    %v56 = vpop.xlane.xlu0 %55
    %v57 = vsel %vm53, %v52, 0.0
    %58 = vadd.xlane.f32.xlu0 %v57
    %v59 = vpop.xlane.xlu0 %58
    %v60 = vld [vmem:[%s3] sm:$0x1]
    %v62 = vlaneseq
    %v63 = vshrl.u32 %v62, 7
    %v64 = vsub.s32 0, %v63
    %v65 = vrot.slane %v60, %v64
    %v67 = vmul.f32 %v42, %v65
    %v68 = vmul.f32 %v43, %v65
    %v69 = vsel %vm53, %v67, 0.0
    %70 = vadd.xlane.f32.xlu0 %v69
    %v71 = vpop.xlane.xlu0 %70
    %v72 = vsel %vm53, %v68, 0.0
    %73 = vadd.xlane.f32.xlu0 %v72
    %v74 = vpop.xlane.xlu0 %73
    %v75 = vadd.f32 %v56, %v71
    %v76 = vadd.f32 %v59, %v74
    %v77 = vld [vmem:[#allocation2] sm:$0x1]
    %v79 = vlaneseq
    %v80 = vshrl.u32 %v79, 7
    %v81 = vsub.s32 0, %v80
    %v82 = vrot.slane %v77, %v81
    %83 = vset.pattern.permute.xlu0 0
    %84 = vperm.xlu0 %83, %v82
    %v85 = vpop.permute.xlu0 %84
    %v87 = vadd.f32 %v75, %v85
    %v88 = vadd.f32 %v76, %v85
    %v89 = vtanh.pop %v87
    %v90 = vtanh.pop %v88
    %v93 = vlaneseq
    %v94 = vand.u32 %v93, 127
    %v95 = vlaneseq
    %v96 = vshrl.u32 %v95, 7
    %v97 = vsub.s32 %v94, %v96
    %v98 = vrot.slane %v89, %v97
    %v99 = vlaneseq
    %v100 = vshrl.u32 %v99, 7
    %v101 = vsub.s32 %v94, %v100
    %v102 = vrot.slane %v90, %v101
    %vm103 = vcmask 1041409
    %v104 = vsel %vm103, %v102, %v98
    %vm106 = vcmask 64512
    %v107 = vsel %vm106, %v104, -1e+30
    %vm108 = vcmask 1041408
    %v109 = vsel %vm108, %v107, -inf
    %110 = vmax.xlane.f32.xlu0 %v109
    %v111 = vpop.xlane.xlu0 %110
    %v112 = vsub.f32 %v107, %v111
    %v113 = vmul.f32 %v112, 1.442695
    %v114 = vpow.pop %v113
    %v115 = vsel %vm108, %v114, 0.0
    %116 = vadd.xlane.f32.xlu0 %v115
    %v117 = vpop.xlane.xlu0 %116
    %v118 = vrcp.pop %v117
    %v119 = vmul.f32 %v114, %v118
    %v120 = vlaneseq
    %v121 = vshrl.u32 %v120, 7
    %v122 = vsub.s32 0, %v121
    %v123 = vrot.slane %v119, %v122
    %125 = vbcast.lane.b32.xlu0 %v123, 256
    %v126 = vpop.permute.xlu0 %125
    %v127 = vlaneseq
    %v128 = vshrl.u32 %v127, 7
    %v129 = vsub.s32 1, %v128
    %v130 = vrot.slane %v119, %v129
    %132 = vbcast.lane.b32.xlu0 %v130, 256
    %v133 = vpop.permute.xlu0 %132
    %v134 = vmul.f32 %v126, %v38
    %v135 = vmul.f32 %v133, %v39
    %v136 = vsel %vm53, %v134, 0.0
    %v137 = vrot.slane %v136, 4
    %v138 = vadd.f32 %v136, %v137
    %v139 = vrot.slane %v138, 2
    %v140 = vadd.f32 %v138, %v139
    %v141 = vrot.slane %v140, 1
    %v142 = vadd.f32 %v140, %v141
    %v143 = vsel %vm53, %v135, 0.0
    %v144 = vrot.slane %v143, 4
    %v145 = vadd.f32 %v143, %v144
    %v146 = vrot.slane %v145, 2
    %v147 = vadd.f32 %v145, %v146
    %v148 = vrot.slane %v147, 1
    %v149 = vadd.f32 %v147, %v148
    %v150 = vmul.f32 %v126, %v42
    %v151 = vmul.f32 %v133, %v43
    %v152 = vsel %vm53, %v150, 0.0
    %v153 = vrot.slane %v152, 4
    %v154 = vadd.f32 %v152, %v153
    %v155 = vrot.slane %v154, 2
    %v156 = vadd.f32 %v154, %v155
    %v157 = vrot.slane %v156, 1
    %v158 = vadd.f32 %v156, %v157
    %v159 = vsel %vm53, %v151, 0.0
    %v160 = vrot.slane %v159, 4
    %v161 = vadd.f32 %v159, %v160
    %v162 = vrot.slane %v161, 2
    %v163 = vadd.f32 %v161, %v162
    %v164 = vrot.slane %v163, 1
    %v165 = vadd.f32 %v163, %v164
    %v166 = vpack.c.bf16 %v142, %v142
    %v167 = vpack.c.bf16 %v149, %v149
    %v168 = vld [vmem:[%s5] sm:$0xf]
    %v169 = vld [vmem:[%s5 + $0x4] sm:$0xf]
    %v170 = vld [vmem:[%s5 + $0x8] sm:$0xf]
    %v171 = vld [vmem:[%s5 + $0xc] sm:$0xf]
    %v172 = vpack.c.bf16 %v158, %v158
    %v173 = vpack.c.bf16 %v165, %v165
    %v174 = vld [vmem:[%s6] sm:$0xf]
    %v175 = vld [vmem:[%s6 + $0x4] sm:$0xf]
    %v176 = vld [vmem:[%s6 + $0x8] sm:$0xf]
    %v177 = vld [vmem:[%s6 + $0xc] sm:$0xf]
    %v180 = vunpack.c.l.b16 %v172
    %v181 = vunpack.c.l.b16 %v173
    %v182 = vsel %vm103, %v181, %v180
    %v183 = vpack.c.b16 %v182, %v182
    %v188 = vunpack.c.l.b16 %v174
    %v189 = vunpack.c.l.b16 %v175
    %v190 = vunpack.c.l.b16 %v176
    %v191 = vunpack.c.l.b16 %v177
    %v192 = vpack.c.b16 %v189, %v188
    %v193 = vpack.c.b16 %v191, %v190
    %v197 = vsel %vm53, %v183, 0
    %199 = vmatprep.subr.bf16.mxu0 0
    %200 = vmatpush1.bf16.msra.mxu0 0
    %201 = vmatprep.subr.bf16.mxu0 0
    %202 = vmatpush1.bf16.msra.mxu0 0
    %203 = vmatprep.subr.bf16.mxu0 0
    %204 = vmatpush1.bf16.msra.mxu0 0
    %205 = vmatprep.subr.bf16.mxu0 0
    %206 = vmatpush1.bf16.msra.mxu0 0
    %207 = vmatprep.subr.bf16.mxu0 0
    %208 = vmatpush1.bf16.msra.mxu0 0
    %209 = vmatprep.subr.bf16.mxu0 0
    %210 = vmatpush1.bf16.msra.mxu0 0
    %211 = vmatprep.subr.bf16.mxu0 0
    %212 = vmatpush1.bf16.msra.mxu0 %v193
    %213 = vmatprep.subr.bf16.mxu0 0
    %214 = vmatpush1.bf16.msra.mxu0 %v192
    %215 = vmatprep.subr.bf16.mxu0 0
    %216 = vmatpush2.bf16.msra.mxu0 0
    %217 = vmatprep.subr.bf16.mxu0 0
    %218 = vmatpush2.bf16.msra.mxu0 0
    %219 = vmatprep.subr.bf16.mxu0 0
    %220 = vmatpush2.bf16.msra.mxu0 0
    %221 = vmatprep.subr.bf16.mxu0 0
    %222 = vmatpush2.bf16.msra.mxu0 0
    %223 = vmatprep.subr.bf16.mxu0 0
    %224 = vmatpush2.bf16.msra.mxu0 0
    %225 = vmatprep.subr.bf16.mxu0 0
    %226 = vmatpush2.bf16.msra.mxu0 0
    %227 = vmatprep.subr.bf16.mxu0 0
    %228 = vmatpush2.bf16.msra.mxu0 0
    %229 = vmatprep.subr.bf16.mxu0 0
    %230 = vmatpush2.bf16.msra.mxu0 0
    %231 = vmatprep.mubr.bf16.mxu0 0
    %232 = vmatmul.mubr.bf16.gmra.mxu0 %v197
    %v233 = vpop.f32.mrf.mxu0
    %v234 = vadd.f32 0.0, %v233
    %v235 = vpop.f32.mrf.mxu0
    %v236 = vpop.f32.mrf.mxu0
    %v237 = vpop.f32.mrf.mxu0
    %238 = vdwg.mxu0
    %v241 = vunpack.c.l.b16 %v166
    %v242 = vunpack.c.l.b16 %v167
    %v243 = vsel %vm103, %v242, %v241
    %v244 = vpack.c.b16 %v243, %v243
    %v249 = vunpack.c.l.b16 %v168
    %v250 = vunpack.c.l.b16 %v169
    %v251 = vunpack.c.l.b16 %v170
    %v252 = vunpack.c.l.b16 %v171
    %v253 = vpack.c.b16 %v250, %v249
    %v254 = vpack.c.b16 %v252, %v251
    %v258 = vsel %vm53, %v244, 0
    %260 = vmatprep.subr.bf16.mxu0 0
    %261 = vmatpush1.bf16.msra.mxu0 0
    %262 = vmatprep.subr.bf16.mxu0 0
    %263 = vmatpush1.bf16.msra.mxu0 0
    %264 = vmatprep.subr.bf16.mxu0 0
    %265 = vmatpush1.bf16.msra.mxu0 0
    %266 = vmatprep.subr.bf16.mxu0 0
    %267 = vmatpush1.bf16.msra.mxu0 0
    %268 = vmatprep.subr.bf16.mxu0 0
    %269 = vmatpush1.bf16.msra.mxu0 0
    %270 = vmatprep.subr.bf16.mxu0 0
    %271 = vmatpush1.bf16.msra.mxu0 0
    %272 = vmatprep.subr.bf16.mxu0 0
    %273 = vmatpush1.bf16.msra.mxu0 %v254
    %274 = vmatprep.subr.bf16.mxu0 0
    %275 = vmatpush1.bf16.msra.mxu0 %v253
    %276 = vmatprep.subr.bf16.mxu0 0
    %277 = vmatpush2.bf16.msra.mxu0 0
    %278 = vmatprep.subr.bf16.mxu0 0
    %279 = vmatpush2.bf16.msra.mxu0 0
    %280 = vmatprep.subr.bf16.mxu0 0
    %281 = vmatpush2.bf16.msra.mxu0 0
    %282 = vmatprep.subr.bf16.mxu0 0
    %283 = vmatpush2.bf16.msra.mxu0 0
    %284 = vmatprep.subr.bf16.mxu0 0
    %285 = vmatpush2.bf16.msra.mxu0 0
    %286 = vmatprep.subr.bf16.mxu0 0
    %287 = vmatpush2.bf16.msra.mxu0 0
    %288 = vmatprep.subr.bf16.mxu0 0
    %289 = vmatpush2.bf16.msra.mxu0 0
    %290 = vmatprep.subr.bf16.mxu0 0
    %291 = vmatpush2.bf16.msra.mxu0 0
    %292 = vmatprep.mubr.bf16.mxu0 0
    %293 = vmatmul.mubr.bf16.gmra.mxu0 %v258
    %v294 = vpop.f32.mrf.mxu0
    %v295 = vadd.f32 %v234, %v294
    %v296 = vpop.f32.mrf.mxu0
    %v297 = vpop.f32.mrf.mxu0
    %v298 = vpop.f32.mrf.mxu0
    %299 = vdwg.mxu0
    %v300 = vld [vmem:[%s7] sm:$0x1]
    %v302 = vlaneseq
    %v303 = vshrl.u32 %v302, 7
    %v304 = vsub.s32 0, %v303
    %v305 = vrot.slane %v300, %v304
    %v307 = vadd.f32 %v295, %v305
    %308 = vst [vmem:[#allocation3] sm:$0x3] %v307
    %309 = vst [vmem:[#allocation5] sm:$0x3] %v119
    // Predicated region
    $region34: #{basic_attn_forward.5} parent=1 // pred_check
      _
    $region35: #{basic_attn_forward.5} parent=1 // pred_check_branch
      %311 = sbr.rel (0) target = $region37
    $region36: #{basic_attn_forward.5} parent=1 // pred_region
      %s313 = ssub.s32 32, 32
      %314 = vsyncadd [#allocation4], %s313
      %s316 = sshll.u32 [#allocation3], 4
      %s317 = int_to_ptr.vmem [resolvable:$true] %s316
      %319 = dma.vmem_to_hbm [thread:$0]  %s317, 32, %s8, [#allocation4]
    $region37: #{basic_attn_forward.5} parent=1 // pred_fallthru
      _
    // Predicated region
    $region38: #{basic_attn_forward.5} parent=1 // pred_check
      _
    $region39: #{basic_attn_forward.5} parent=1 // pred_check_branch
      %321 = sbr.rel (0) target = $region41
    $region40: #{basic_attn_forward.5} parent=1 // pred_region
      %s323 = ssub.s32 32, 32
      %324 = vsyncadd [#allocation6], %s323
      %s326 = sshll.u32 [#allocation5], 4
      %s327 = int_to_ptr.vmem [resolvable:$true] %s326
      %329 = dma.vmem_to_hbm [thread:$0]  %s327, 32, %s9, [#allocation6]
    $region41: #{basic_attn_forward.5} parent=1 // pred_fallthru
      _
    // Predicated region
    $region42: #{basic_attn_forward.5} parent=1 // pred_check
      _
    $region43: #{basic_attn_forward.5} parent=1 // pred_check_branch
      %331 = sbr.rel (0) target = $region45
    $region44: #{basic_attn_forward.5} parent=1 // pred_region
      %332 = dma.done [#allocation4], 32
    $region45: #{basic_attn_forward.5} parent=1 // pred_fallthru
      _
    // Predicated region
    $region46: #{basic_attn_forward.5} parent=1 // pred_check
      _
    $region47: #{basic_attn_forward.5} parent=1 // pred_check_branch
      %334 = sbr.rel (0) target = $region49
    $region48: #{basic_attn_forward.5} parent=1 // pred_region
      %335 = dma.done [#allocation6], 32
    $region49: #{basic_attn_forward.5} parent=1 // pred_fallthru
      _
    %336 = vsyncpa [#allocation4], 1
    %337 = vsyncpa [#allocation6], 1

// kernel: basic_attn_forward.3
$region0: #{basic_attn_forward.3}
  #allocation0 [shape = 'u32[]', space=smem, size = 0x4, offset = 0x4, fixed_abs, tag = 'smem constant byte address 0x4 - core index']
  #allocation1 [shape = 'u32[144,128]{1,0:T(1,128)}', space=vmem, size = 0x12000, scoped, tag = 'internal scratch']
  %s0 = inlined_call_operand.vmem [shape: bf16[16,32], index: 0, kind: input, shape index: {}]
  %s1 = inlined_call_operand.vmem [shape: bf16[32,96], index: 1, kind: input, shape index: {}]
  %s2 = inlined_call_operand.vmem [shape: bf16[32,96], index: 2, kind: input, shape index: {}]
  %s3 = inlined_call_operand.vmem [shape: f32[1,96], index: 3, kind: input, shape index: {}]
  %s4 = inlined_call_operand.vmem [shape: f32[1,96], index: 4, kind: input, shape index: {}]
  %s5 = inlined_call_operand.vmem [shape: bf16[2,16,96], index: 5, kind: output, shape index: {}]
  %s6 = sld [smem:[#allocation0]]
  $region30: #{basic_attn_forward.3} parent=0
    _
  %s8 = ssub.s32 1, %s6
  %s9 = scalar_select 0, %s8, %s6
  // Predicated region
  $region2: #{basic_attn_forward.3} parent=0 // pred_check
    _
  $region3: #{basic_attn_forward.3} parent=0 // pred_check_branch
    %11 = sbr.rel (0) target = $region5
  $region4: #{basic_attn_forward.3} parent=0 // pred_region
    _
  $region5: #{basic_attn_forward.3} parent=0 // pred_fallthru
    _
  // Predicated region
  $region6: #{basic_attn_forward.3} parent=0 // pred_check
    _
  $region7: #{basic_attn_forward.3} parent=0 // pred_check_branch
    %13 = sbr.rel (0) target = $region9
  $region8: #{basic_attn_forward.3} parent=0 // pred_region
    _
  $region9: #{basic_attn_forward.3} parent=0 // pred_fallthru
    _
  // Predicated region
  $region10: #{basic_attn_forward.3} parent=0 // pred_check
    _
  $region11: #{basic_attn_forward.3} parent=0 // pred_check_branch
    %15 = sbr.rel (0) target = $region13
  $region12: #{basic_attn_forward.3} parent=0 // pred_region
    _
  $region13: #{basic_attn_forward.3} parent=0 // pred_fallthru
    _
  // Predicated region
  $region14: #{basic_attn_forward.3} parent=0 // pred_check
    _
  $region15: #{basic_attn_forward.3} parent=0 // pred_check_branch
    %17 = sbr.rel (0) target = $region17
  $region16: #{basic_attn_forward.3} parent=0 // pred_region
    _
  $region17: #{basic_attn_forward.3} parent=0 // pred_fallthru
    _
  // Predicated region
  $region18: #{basic_attn_forward.3} parent=0 // pred_check
    _
  $region19: #{basic_attn_forward.3} parent=0 // pred_check_branch
    %19 = sbr.rel (0) target = $region21
  $region20: #{basic_attn_forward.3} parent=0 // pred_region
    _
  $region21: #{basic_attn_forward.3} parent=0 // pred_fallthru
    _
  %v21 = vld [vmem:[%s0] sm:$0xf]
  %v22 = vld [vmem:[%s0 + $0x4] sm:$0xf]
  %v23 = vld [vmem:[%s1] sm:$0xf]
  %v24 = vld [vmem:[%s1 + $0x4] sm:$0xf]
  %v25 = vld [vmem:[%s1 + $0x8] sm:$0xf]
  %v26 = vld [vmem:[%s1 + $0xc] sm:$0xf]
  %v27 = vld [vmem:[%s3] sm:$0x1]
  %v29 = vlaneseq
  %v30 = vshrl.u32 %v29, 7
  %v31 = vsub.s32 0, %v30
  %v32 = vrot.slane %v27, %v31
  %v36 = vunpack.c.l.b16 %v21
  %v37 = vunpack.c.l.b16 %v22
  %v38 = vpack.c.b16 %v37, %v36
  %v43 = vunpack.c.l.b16 %v23
  %v44 = vunpack.c.l.b16 %v24
  %v45 = vunpack.c.l.b16 %v25
  %v46 = vunpack.c.l.b16 %v26
  %v47 = vpack.c.b16 %v44, %v43
  %v48 = vpack.c.b16 %v46, %v45
  %vm51 = vcmask 261120
  %v53 = vsel %vm51, %v38, 0
  %55 = vmatprep.subr.bf16.mxu0 0
  %56 = vmatpush1.bf16.msra.mxu0 0
  %57 = vmatprep.subr.bf16.mxu0 0
  %58 = vmatpush1.bf16.msra.mxu0 0
  %59 = vmatprep.subr.bf16.mxu0 0
  %60 = vmatpush1.bf16.msra.mxu0 0
  %61 = vmatprep.subr.bf16.mxu0 0
  %62 = vmatpush1.bf16.msra.mxu0 0
  %63 = vmatprep.subr.bf16.mxu0 0
  %64 = vmatpush1.bf16.msra.mxu0 0
  %65 = vmatprep.subr.bf16.mxu0 0
  %66 = vmatpush1.bf16.msra.mxu0 0
  %67 = vmatprep.subr.bf16.mxu0 0
  %68 = vmatpush1.bf16.msra.mxu0 %v48
  %69 = vmatprep.subr.bf16.mxu0 0
  %70 = vmatpush1.bf16.msra.mxu0 %v47
  %71 = vmatprep.subr.bf16.mxu0 0
  %72 = vmatpush2.bf16.msra.mxu0 0
  %73 = vmatprep.subr.bf16.mxu0 0
  %74 = vmatpush2.bf16.msra.mxu0 0
  %75 = vmatprep.subr.bf16.mxu0 0
  %76 = vmatpush2.bf16.msra.mxu0 0
  %77 = vmatprep.subr.bf16.mxu0 0
  %78 = vmatpush2.bf16.msra.mxu0 0
  %79 = vmatprep.subr.bf16.mxu0 0
  %80 = vmatpush2.bf16.msra.mxu0 0
  %81 = vmatprep.subr.bf16.mxu0 0
  %82 = vmatpush2.bf16.msra.mxu0 0
  %83 = vmatprep.subr.bf16.mxu0 0
  %84 = vmatpush2.bf16.msra.mxu0 0
  %85 = vmatprep.subr.bf16.mxu0 0
  %86 = vmatpush2.bf16.msra.mxu0 0
  %87 = vmatprep.mubr.bf16.mxu0 0
  %88 = vmatmul.mubr.bf16.gmra.mxu0 %v53
  %v89 = vpop.f32.mrf.mxu0
  %v90 = vadd.f32 %v32, %v89
  %v91 = vpop.f32.mrf.mxu0
  %v92 = vpop.f32.mrf.mxu0
  %v93 = vadd.f32 %v32, %v92
  %v94 = vpop.f32.mrf.mxu0
  %95 = vdwg.mxu0
  %v96 = vld [vmem:[%s2] sm:$0xf]
  %v97 = vld [vmem:[%s2 + $0x4] sm:$0xf]
  %v98 = vld [vmem:[%s2 + $0x8] sm:$0xf]
  %v99 = vld [vmem:[%s2 + $0xc] sm:$0xf]
  %v100 = vld [vmem:[%s4] sm:$0x1]
  %v102 = vlaneseq
  %v103 = vshrl.u32 %v102, 7
  %v104 = vsub.s32 0, %v103
  %v105 = vrot.slane %v100, %v104
  %v111 = vunpack.c.l.b16 %v96
  %v112 = vunpack.c.l.b16 %v97
  %v113 = vunpack.c.l.b16 %v98
  %v114 = vunpack.c.l.b16 %v99
  %v115 = vpack.c.b16 %v112, %v111
  %v116 = vpack.c.b16 %v114, %v113
  %119 = vmatprep.subr.bf16.mxu0 0
  %120 = vmatpush1.bf16.msra.mxu0 0
  %121 = vmatprep.subr.bf16.mxu0 0
  %122 = vmatpush1.bf16.msra.mxu0 0
  %123 = vmatprep.subr.bf16.mxu0 0
  %124 = vmatpush1.bf16.msra.mxu0 0
  %125 = vmatprep.subr.bf16.mxu0 0
  %126 = vmatpush1.bf16.msra.mxu0 0
  %127 = vmatprep.subr.bf16.mxu0 0
  %128 = vmatpush1.bf16.msra.mxu0 0
  %129 = vmatprep.subr.bf16.mxu0 0
  %130 = vmatpush1.bf16.msra.mxu0 0
  %131 = vmatprep.subr.bf16.mxu0 0
  %132 = vmatpush1.bf16.msra.mxu0 %v116
  %133 = vmatprep.subr.bf16.mxu0 0
  %134 = vmatpush1.bf16.msra.mxu0 %v115
  %135 = vmatprep.subr.bf16.mxu0 0
  %136 = vmatpush2.bf16.msra.mxu0 0
  %137 = vmatprep.subr.bf16.mxu0 0
  %138 = vmatpush2.bf16.msra.mxu0 0
  %139 = vmatprep.subr.bf16.mxu0 0
  %140 = vmatpush2.bf16.msra.mxu0 0
  %141 = vmatprep.subr.bf16.mxu0 0
  %142 = vmatpush2.bf16.msra.mxu0 0
  %143 = vmatprep.subr.bf16.mxu0 0
  %144 = vmatpush2.bf16.msra.mxu0 0
  %145 = vmatprep.subr.bf16.mxu0 0
  %146 = vmatpush2.bf16.msra.mxu0 0
  %147 = vmatprep.subr.bf16.mxu0 0
  %148 = vmatpush2.bf16.msra.mxu0 0
  %149 = vmatprep.subr.bf16.mxu0 0
  %150 = vmatpush2.bf16.msra.mxu0 0
  %151 = vmatprep.mubr.bf16.mxu0 0
  %152 = vmatmul.mubr.bf16.gmra.mxu0 %v53
  %v153 = vpop.f32.mrf.mxu0
  %v154 = vadd.f32 %v105, %v153
  %v155 = vpop.f32.mrf.mxu0
  %v156 = vpop.f32.mrf.mxu0
  %v157 = vadd.f32 %v105, %v156
  %v158 = vpop.f32.mrf.mxu0
  %159 = vdwg.mxu0
  %v160 = vpack.c.bf16 %v93, %v90
  %v162 = vunpack.c.l.b16 %v160
  %v163 = vunpack.c.h.b16 %v160
  %v164 = vpack.c.b16 %v162, %v162
  %v165 = vpack.c.b16 %v163, %v163
  %vm168 = vcmask 781312
  %169 = vst.msk [vmem:[%s5] sm:$0xf] %vm168, %v164
  %170 = vst.msk [vmem:[%s5 + $0x4] sm:$0xf] %vm168, %v165
  %v171 = vpack.c.bf16 %v157, %v154
  %v173 = vunpack.c.l.b16 %v171
  %v174 = vunpack.c.h.b16 %v171
  %v175 = vpack.c.b16 %v173, %v173
  %v176 = vpack.c.b16 %v174, %v174
  %s179 = scalar_lea.vmem %s5, 8
  %180 = vst.msk [vmem:[%s179] sm:$0xf] %vm168, %v175
  %181 = vst.msk [vmem:[%s179 + $0x4] sm:$0xf] %vm168, %v176
  // Predicated region
  $region22: #{basic_attn_forward.3} parent=0 // pred_check
    _
  $region23: #{basic_attn_forward.3} parent=0 // pred_check_branch
    %183 = sbr.rel (0) target = $region25
  $region24: #{basic_attn_forward.3} parent=0 // pred_region
    _
  $region25: #{basic_attn_forward.3} parent=0 // pred_fallthru
    _
  // Predicated region
  $region26: #{basic_attn_forward.3} parent=0 // pred_check
    _
  $region27: #{basic_attn_forward.3} parent=0 // pred_check_branch
    %185 = sbr.rel (0) target = $region29
  $region28: #{basic_attn_forward.3} parent=0 // pred_region
    _
  $region29: #{basic_attn_forward.3} parent=0 // pred_fallthru
    _

// kernel: basic_attn_forward.4
$region0: #{basic_attn_forward.4}
  #allocation0 [shape = 'u32[]', space=smem, size = 0x4, offset = 0x4, fixed_abs, tag = 'smem constant byte address 0x4 - core index']
  #allocation1 [shape = 'u32[144,128]{1,0:T(1,128)}', space=vmem, size = 0x12000, scoped, tag = 'internal scratch']
  #allocation2 [shape = 'f32[2,32]{1,0:T(2,128)}', space=vmem, size = 0x400, scoped, tag = 'scratch operand']
  %s0 = inlined_call_operand.vmem [shape: bf16[2,8,2,96], index: 0, kind: input, shape index: {}]
  %s1 = inlined_call_operand.vmem [shape: bf16[2,32,96], index: 1, kind: input, shape index: {}]
  %s2 = inlined_call_operand.vmem [shape: f32[2,1,96], index: 2, kind: input, shape index: {}]
  %s3 = inlined_call_operand.vmem [shape: f32[2,2,32], index: 3, kind: input, shape index: {}]
  %s4 = inlined_call_operand.vmem [shape: bf16[2,8,2,32], index: 4, kind: output, shape index: {0}]
  %s5 = inlined_call_operand.hbm [shape: f32[2,2,32], index: 5, kind: output, shape index: {1}]
  %6 = xla_tuple %s4, %s5
  %s7 = sld [smem:[#allocation0]]
  $region65: #{basic_attn_forward.4} parent=0
    _
  %s9 = ssub.s32 1, %s7
  %s10 = scalar_select 0, %s9, %s7
  $region1: #{basic_attn_forward.4} parent=0
    #allocation3 [shape = 'u8[2048]{0}', space=vmem, size = 0x800, scoped, tag = 'output window, operand 1']
    #allocation4 [shape = 's32[2]{0}', space=sflag, size = 0x8, scoped, tag = 'scoped memory for basic_attn_forward.4']
    %11 = vsyncpa [#allocation4], 0
    %s12 = scalar_lea.sflag [#allocation4], 1
    %13 = vsyncpa %s12, 0
    loop: start=0, step=1, limit=4
    $region2: #{basic_attn_forward.4} parent=1 // loop_pre_header
      _
    $region3: #{basic_attn_forward.4} parent=1 // loop_header
      %s15 = sphi 0, %s19
      %p16 = scmp.ge.s32.totalorder %s15, 4
      %s22 = sphi 0, %s34
      %s23 = sphi 0, %s30
      %s24 = sphi 0, %s22
      %s25 = sphi 0, %s23
      %s26 = sphi 0, %s24
      %s27 = sphi 0, %s25
      %s49 = sphi 0, %s51
      %s52 = sphi 0, %s49
      %s53 = sphi 0, %s52
      %s69 = sphi 0, %s53
      %s75 = sphi 0, %s77
      %s78 = sphi 0, %s75
      %s79 = sphi 0, %s78
      %s95 = sphi 0, %s79
      %s101 = sphi 0, %s103
      %s104 = sphi 0, %s101
      %s105 = sphi 0, %s104
      %s121 = sphi 0, %s105
      %s127 = sphi 0, %s129
      %s130 = sphi 0, %s127
      %s131 = sphi 0, %s130
      %s147 = sphi 0, %s131
      %s165 = sphi 0, %s167
      %s168 = sphi 0, %s165
      %s169 = sphi 0, %s168
      %s185 = sphi 0, %s169
      %s191 = sphi 0, %s193
      %s194 = sphi 0, %s191
      %s195 = sphi 0, %s194
      %s211 = sphi 0, %s195
    $region4: #{basic_attn_forward.4} parent=1 // loop_header_branch
      %18 = sbr.rel (%p16) target = $region8
    $region5: #{basic_attn_forward.4} parent=1 // loop_body
      %s20 = ssub.s32 %s15, 1
      %s21 = ssub.s32 %s15, 2
      %s28 = sadd.s32 1, %s23
      %p29 = scmp.ge.s32.totalorder %s28, 1
      %s30 = scalar_select %p29, 0, %s28
      %s31 = sadd.s32 1, %s22
      %s32 = scalar_select %p29, %s31, %s22
      %p33 = scmp.ge.s32.totalorder %s32, 2
      %s34 = scalar_select %p33, 0, %s32
      %s35 = ssub.s32 1, %s22
      %s36 = smul.u32 %s35, %s23
      %s37 = ssub.s32 0, %s23
      %s38 = smul.u32 %s22, %s37
      %s39 = sadd.s32 %s36, %s38
      %s40 = ssub.s32 1, %s34
      %s41 = smul.u32 %s40, %s30
      %s42 = ssub.s32 0, %s30
      %s43 = smul.u32 %s34, %s42
      %s44 = sadd.s32 %s41, %s43
      %s45 = ssub.s32 %s22, %s34
      %s46 = ssub.s32 %s39, %s44
      %s47 = sor.u32 %s45, %s46
      %p48 = scmp.eq.s32.totalorder %s47, 0
      %s50 = sadd.s32 %s49, 1
      %s51 = scalar_select %p48, %s49, %s50
      %p54 = pneg %p48
      %p55 = scmp.eq.s32.totalorder %s15, 1
      %p56 = por %p54, %p55
      %p57 = scmp.ne.s32.totalorder %s49, %s52
      %p58 = scmp.eq.s32.totalorder %s15, 0
      %p59 = por %p57, %p58
      %p60 = scmp.ne.s32.totalorder %s49, %s52
      %p61 = scmp.eq.s32.totalorder %s20, 1
      %p62 = por %p60, %p61
      %p63 = scmp.ne.s32.totalorder %s52, %s53
      %p64 = scmp.eq.s32.totalorder %s20, 0
      %p65 = por %p63, %p64
      %p66 = scmp.ne.s32.totalorder %s52, %s53
      %p67 = scmp.eq.s32.totalorder %s21, 1
      %p68 = por %p66, %p67
      %p70 = scmp.ne.s32.totalorder %s53, %s69
      %p71 = scmp.eq.s32.totalorder %s21, 0
      %p72 = por %p70, %p71
      %s73 = ssub.s32 %s22, %s34
      %p74 = scmp.eq.s32.totalorder %s73, 0
      %s76 = sadd.s32 %s75, 1
      %s77 = scalar_select %p74, %s75, %s76
      %p80 = pneg %p74
      %p81 = scmp.eq.s32.totalorder %s15, 1
      %p82 = por %p80, %p81
      %p83 = scmp.ne.s32.totalorder %s75, %s78
      %p84 = scmp.eq.s32.totalorder %s15, 0
      %p85 = por %p83, %p84
      %p86 = scmp.ne.s32.totalorder %s75, %s78
      %p87 = scmp.eq.s32.totalorder %s20, 1
      %p88 = por %p86, %p87
      %p89 = scmp.ne.s32.totalorder %s78, %s79
      %p90 = scmp.eq.s32.totalorder %s20, 0
      %p91 = por %p89, %p90
      %p92 = scmp.ne.s32.totalorder %s78, %s79
      %p93 = scmp.eq.s32.totalorder %s21, 1
      %p94 = por %p92, %p93
      %p96 = scmp.ne.s32.totalorder %s79, %s95
      %p97 = scmp.eq.s32.totalorder %s21, 0
      %p98 = por %p96, %p97
      %s99 = ssub.s32 %s22, %s34
      %p100 = scmp.eq.s32.totalorder %s99, 0
      %s102 = sadd.s32 %s101, 1
      %s103 = scalar_select %p100, %s101, %s102
      %p106 = pneg %p100
      %p107 = scmp.eq.s32.totalorder %s15, 1
      %p108 = por %p106, %p107
      %p109 = scmp.ne.s32.totalorder %s101, %s104
      %p110 = scmp.eq.s32.totalorder %s15, 0
      %p111 = por %p109, %p110
      %p112 = scmp.ne.s32.totalorder %s101, %s104
      %p113 = scmp.eq.s32.totalorder %s20, 1
      %p114 = por %p112, %p113
      %p115 = scmp.ne.s32.totalorder %s104, %s105
      %p116 = scmp.eq.s32.totalorder %s20, 0
      %p117 = por %p115, %p116
      %p118 = scmp.ne.s32.totalorder %s104, %s105
      %p119 = scmp.eq.s32.totalorder %s21, 1
      %p120 = por %p118, %p119
      %p122 = scmp.ne.s32.totalorder %s105, %s121
      %p123 = scmp.eq.s32.totalorder %s21, 0
      %p124 = por %p122, %p123
      %s125 = ssub.s32 %s22, %s34
      %p126 = scmp.eq.s32.totalorder %s125, 0
      %s128 = sadd.s32 %s127, 1
      %s129 = scalar_select %p126, %s127, %s128
      %p132 = pneg %p126
      %p133 = scmp.eq.s32.totalorder %s15, 1
      %p134 = por %p132, %p133
      %p135 = scmp.ne.s32.totalorder %s127, %s130
      %p136 = scmp.eq.s32.totalorder %s15, 0
      %p137 = por %p135, %p136
      %p138 = scmp.ne.s32.totalorder %s127, %s130
      %p139 = scmp.eq.s32.totalorder %s20, 1
      %p140 = por %p138, %p139
      %p141 = scmp.ne.s32.totalorder %s130, %s131
      %p142 = scmp.eq.s32.totalorder %s20, 0
      %p143 = por %p141, %p142
      %p144 = scmp.ne.s32.totalorder %s130, %s131
      %p145 = scmp.eq.s32.totalorder %s21, 1
      %p146 = por %p144, %p145
      %p148 = scmp.ne.s32.totalorder %s131, %s147
      %p149 = scmp.eq.s32.totalorder %s21, 0
      %p150 = por %p148, %p149
      %s151 = ssub.s32 1, %s22
      %s152 = smul.u32 %s151, %s23
      %s153 = ssub.s32 0, %s23
      %s154 = smul.u32 %s22, %s153
      %s155 = sadd.s32 %s152, %s154
      %s156 = ssub.s32 1, %s34
      %s157 = smul.u32 %s156, %s30
      %s158 = ssub.s32 0, %s30
      %s159 = smul.u32 %s34, %s158
      %s160 = sadd.s32 %s157, %s159
      %s161 = ssub.s32 %s22, %s34
      %s162 = ssub.s32 %s155, %s160
      %s163 = sor.u32 %s161, %s162
      %p164 = scmp.eq.s32.totalorder %s163, 0
      %s166 = sadd.s32 %s165, 1
      %s167 = scalar_select %p164, %s165, %s166
      %p170 = pneg %p164
      %p171 = scmp.eq.s32.totalorder %s15, 1
      %p172 = por %p170, %p171
      %p173 = scmp.ne.s32.totalorder %s165, %s168
      %p174 = scmp.eq.s32.totalorder %s15, 0
      %p175 = por %p173, %p174
      %p176 = scmp.ne.s32.totalorder %s165, %s168
      %p177 = scmp.eq.s32.totalorder %s20, 1
      %p178 = por %p176, %p177
      %p179 = scmp.ne.s32.totalorder %s168, %s169
      %p180 = scmp.eq.s32.totalorder %s20, 0
      %p181 = por %p179, %p180
      %p182 = scmp.ne.s32.totalorder %s168, %s169
      %p183 = scmp.eq.s32.totalorder %s21, 1
      %p184 = por %p182, %p183
      %p186 = scmp.ne.s32.totalorder %s169, %s185
      %p187 = scmp.eq.s32.totalorder %s21, 0
      %p188 = por %p186, %p187
      %s189 = ssub.s32 %s22, %s34
      %p190 = scmp.eq.s32.totalorder %s189, 0
      %s192 = sadd.s32 %s191, 1
      %s193 = scalar_select %p190, %s191, %s192
      %p196 = pneg %p190
      %p197 = scmp.eq.s32.totalorder %s15, 1
      %p198 = por %p196, %p197
      %p199 = scmp.ne.s32.totalorder %s191, %s194
      %p200 = scmp.eq.s32.totalorder %s15, 0
      %p201 = por %p199, %p200
      %p202 = scmp.ne.s32.totalorder %s191, %s194
      %p203 = scmp.eq.s32.totalorder %s20, 1
      %p204 = por %p202, %p203
      %p205 = scmp.ne.s32.totalorder %s194, %s195
      %p206 = scmp.eq.s32.totalorder %s20, 0
      %p207 = por %p205, %p206
      %p208 = scmp.ne.s32.totalorder %s194, %s195
      %p209 = scmp.eq.s32.totalorder %s21, 1
      %p210 = por %p208, %p209
      %p212 = scmp.ne.s32.totalorder %s195, %s211
      %p213 = scmp.eq.s32.totalorder %s21, 0
      %p214 = por %p212, %p213
      %p215 = scmp.le.s32.totalorder 1, %s15
      %p216 = scmp.lt.s32.totalorder %s15, 3
      %p217 = pnand %p215, %p216
      %p218 = pneg %p217
      // Predicated region
      $region9: #{basic_attn_forward.4} parent=5 // pred_check
        _
      $region10: #{basic_attn_forward.4} parent=5 // pred_check_branch
        %220 = sbr.rel (%p217) target = $region12
      $region11: #{basic_attn_forward.4} parent=5 // pred_region
        %s221 = ssub.s32 %s15, 1
      $region12: #{basic_attn_forward.4} parent=5 // pred_fallthru
        _
      %p222 = scmp.lt.s32.totalorder %s15, 2
      // Predicated region
      $region13: #{basic_attn_forward.4} parent=5 // pred_check
        %p223 = pneg %p222
      $region14: #{basic_attn_forward.4} parent=5 // pred_check_branch
        %225 = sbr.rel (%p223) target = $region16
      $region15: #{basic_attn_forward.4} parent=5 // pred_region
        // Predicated region
        $region17: #{basic_attn_forward.4} parent=15 // pred_check
          %p226 = pneg %p59
        $region18: #{basic_attn_forward.4} parent=15 // pred_check_branch
          %228 = sbr.rel (%p226) target = $region20
        $region19: #{basic_attn_forward.4} parent=15 // pred_region
          %s229 = ssub.s32 1, %s22
          %s230 = smul.u32 %s229, %s23
          %s231 = ssub.s32 0, %s23
          %s232 = smul.u32 %s22, %s231
          %s233 = sadd.s32 %s230, %s232
          %s234 = smul.u32 8, %s233
          %p235 = scmp.lt.s32.totalorder %s22, 1
          %s236 = scalar_select %p235, %s22, 1
          %p237 = scmp.lt.s32.totalorder %s234, 7
          %s238 = scalar_select %p237, %s234, 7
          %s239 = smul.addr %s236, 8
          %s240 = sadd.s32 %s238, %s239
          %s241 = scalar_lea.vmem %s0, %s240
          %s242 = ssub.s32 1, %s22
          %s243 = smul.u32 %s242, %s23
          %s244 = ssub.s32 0, %s23
          %s245 = smul.u32 %s22, %s244
          %s246 = sadd.s32 %s243, %s245
          %s247 = smul.u32 8, %s246
        $region20: #{basic_attn_forward.4} parent=15 // pred_fallthru
          _
        // Predicated region
        $region21: #{basic_attn_forward.4} parent=15 // pred_check
          %p248 = pneg %p85
        $region22: #{basic_attn_forward.4} parent=15 // pred_check_branch
          %250 = sbr.rel (%p248) target = $region24
        $region23: #{basic_attn_forward.4} parent=15 // pred_region
          %p251 = scmp.lt.s32.totalorder %s22, 1
          %s252 = scalar_select %p251, %s22, 1
          %s253 = smul.addr %s252, 4
          %s254 = smul.addr %s253, 4
          %s255 = scalar_lea.vmem %s1, %s254
        $region24: #{basic_attn_forward.4} parent=15 // pred_fallthru
          _
        // Predicated region
        $region25: #{basic_attn_forward.4} parent=15 // pred_check
          %p256 = pneg %p111
        $region26: #{basic_attn_forward.4} parent=15 // pred_check_branch
          %258 = sbr.rel (%p256) target = $region28
        $region27: #{basic_attn_forward.4} parent=15 // pred_region
          %p259 = scmp.lt.s32.totalorder %s22, 1
          %s260 = scalar_select %p259, %s22, 1
          %s261 = scalar_lea.vmem %s2, %s260
        $region28: #{basic_attn_forward.4} parent=15 // pred_fallthru
          _
        // Predicated region
        $region29: #{basic_attn_forward.4} parent=15 // pred_check
          %p262 = pneg %p137
        $region30: #{basic_attn_forward.4} parent=15 // pred_check_branch
          %264 = sbr.rel (%p262) target = $region32
        $region31: #{basic_attn_forward.4} parent=15 // pred_region
          %p265 = scmp.lt.s32.totalorder %s22, 1
          %s266 = scalar_select %p265, %s22, 1
          %s267 = smul.addr %s266, 2
          %s268 = scalar_lea.vmem %s3, %s267
        $region32: #{basic_attn_forward.4} parent=15 // pred_fallthru
          _
      $region16: #{basic_attn_forward.4} parent=5 // pred_fallthru
        _
      %p269 = scmp.le.s32.totalorder 1, %s15
      %p270 = scmp.lt.s32.totalorder %s15, 3
      %p271 = pnand %p269, %p270
      %p272 = pneg %p271
      // Predicated region
      $region33: #{basic_attn_forward.4} parent=5 // pred_check
        _
      $region34: #{basic_attn_forward.4} parent=5 // pred_check_branch
        %274 = sbr.rel (%p271) target = $region36
      $region35: #{basic_attn_forward.4} parent=5 // pred_region
        %s275 = ssub.s32 %s15, 1
        %s276 = ssub.s32 1, %s24
        %s277 = smul.u32 %s276, %s25
        %s278 = ssub.s32 0, %s25
        %s279 = smul.u32 %s24, %s278
        %s280 = sadd.s32 %s277, %s279
        %s281 = smul.u32 8, %s280
        %p282 = scmp.lt.s32.totalorder %s24, 1
        %s283 = scalar_select %p282, %s24, 1
        %p284 = scmp.lt.s32.totalorder %s281, 7
        %s285 = scalar_select %p284, %s281, 7
        %s286 = smul.addr %s283, 8
        %s287 = sadd.s32 %s285, %s286
        %s288 = scalar_lea.vmem %s0, %s287
        %p289 = pneg %p65
        %p290 = pneg %p62
        %p291 = scmp.lt.s32.totalorder %s24, 1
        %s292 = scalar_select %p291, %s24, 1
        %s293 = smul.addr %s292, 4
        %s294 = smul.addr %s293, 4
        %s295 = scalar_lea.vmem %s1, %s294
        %p296 = pneg %p91
        %p297 = pneg %p88
        %p298 = scmp.lt.s32.totalorder %s24, 1
        %s299 = scalar_select %p298, %s24, 1
        %s300 = scalar_lea.vmem %s2, %s299
        %p301 = pneg %p117
        %p302 = pneg %p114
        %p303 = scmp.lt.s32.totalorder %s24, 1
        %s304 = scalar_select %p303, %s24, 1
        %s305 = smul.addr %s304, 2
        %s306 = scalar_lea.vmem %s3, %s305
        %p307 = pneg %p143
        %p308 = pneg %p140
        %p309 = pneg %p181
        %p310 = pneg %p178
        %s311 = ssub.s32 1, %s24
        %s312 = smul.u32 %s311, %s25
        %s313 = ssub.s32 0, %s25
        %s314 = smul.u32 %s24, %s313
        %s315 = sadd.s32 %s312, %s314
        %s316 = smul.u32 8, %s315
        %p317 = scmp.lt.s32.totalorder %s24, 1
        %s318 = scalar_select %p317, %s24, 1
        %p319 = scmp.lt.s32.totalorder %s316, 7
        %s320 = scalar_select %p319, %s316, 7
        %s321 = smul.addr %s318, 8
        %s322 = sadd.s32 %s320, %s321
        %s323 = scalar_lea.vmem %s4, %s322
        %p324 = pneg %p207
        %p325 = pneg %p204
        %s326 = sand.u32 %s194, 1
        %s327 = scalar_lea.sflag [#allocation4], %s326
        %s328 = sand.u32 %s194, 1
        %s329 = smul.addr %s328, 2
        %s330 = scalar_lea.vmem [#allocation3], %s329
        %s331 = ssub.s32 1, %s24
        %s332 = smul.u32 %s331, %s25
        %s333 = ssub.s32 0, %s25
        %s334 = smul.u32 %s24, %s333
        %s335 = sadd.s32 %s332, %s334
        %s336 = smul.u32 8, %s335
        %p337 = scmp.lt.s32.totalorder %s24, 1
        %s338 = scalar_select %p337, %s24, 1
        %p339 = scmp.lt.s32.totalorder %s336, 7
        %s340 = scalar_select %p339, %s336, 7
        %s341 = smul.addr %s338, 8
        %s342 = sadd.s32 %s340, %s341
        %s343 = scalar_lea.vmem %s0, %s342
        %s344 = ssub.s32 1, %s24
        %s345 = smul.u32 %s344, %s25
        %s346 = ssub.s32 0, %s25
        %s347 = smul.u32 %s24, %s346
        %s348 = sadd.s32 %s345, %s347
        %s349 = smul.u32 8, %s348
        %p350 = scmp.lt.s32.totalorder %s24, 1
        %s351 = scalar_select %p350, %s24, 1
        %s352 = smul.addr %s351, 4
        %s353 = smul.addr %s352, 4
        %s354 = scalar_lea.vmem %s1, %s353
        %p355 = scmp.lt.s32.totalorder %s24, 1
        %s356 = scalar_select %p355, %s24, 1
        %s357 = scalar_lea.vmem %s2, %s356
        %p358 = scmp.lt.s32.totalorder %s24, 1
        %s359 = scalar_select %p358, %s24, 1
        %s360 = smul.addr %s359, 2
        %s361 = scalar_lea.vmem %s3, %s360
        %s362 = ssub.s32 1, %s24
        %s363 = smul.u32 %s362, %s25
        %s364 = ssub.s32 0, %s25
        %s365 = smul.u32 %s24, %s364
        %s366 = sadd.s32 %s363, %s365
        %s367 = smul.u32 8, %s366
        %p368 = scmp.lt.s32.totalorder %s24, 1
        %s369 = scalar_select %p368, %s24, 1
        %p370 = scmp.lt.s32.totalorder %s367, 7
        %s371 = scalar_select %p370, %s367, 7
        %s372 = smul.addr %s369, 8
        %s373 = sadd.s32 %s371, %s372
        %s374 = scalar_lea.vmem %s4, %s373
        %s375 = ssub.s32 1, %s24
        %s376 = smul.u32 %s375, %s25
        %s377 = ssub.s32 0, %s25
        %s378 = smul.u32 %s24, %s377
        %s379 = sadd.s32 %s376, %s378
        %s380 = smul.u32 8, %s379
        %p382 = scmp.eq.s32.totalorder %s24, 0
        %p383 = scmp.eq.s32.totalorder %s25, 0
        // Predicated region
        $region37: #{basic_attn_forward.4} parent=35 // pred_check
          %p384 = pneg %p383
        $region38: #{basic_attn_forward.4} parent=35 // pred_check_branch
          %386 = sbr.rel (%p384) target = $region40
        $region39: #{basic_attn_forward.4} parent=35 // pred_region
          %v387 = vld [vmem:[%s361] sm:$0x3]
          %vm388 = vcmask 254976
          %389 = vst.msk [vmem:[#allocation2] sm:$0x3] %vm388, %v387
        $region40: #{basic_attn_forward.4} parent=35 // pred_fallthru
          _
        %v390 = vld [vmem:[%s354] sm:$0xf]
        %v391 = vld [vmem:[%s354 + $0x4] sm:$0xf]
        %v392 = vld [vmem:[%s354 + $0x8] sm:$0xf]
        %v393 = vld [vmem:[%s354 + $0xc] sm:$0xf]
        %v394 = vld [vmem:[%s357] sm:$0x1]
        %v395 = vld [vmem:[#allocation2] sm:$0x3]
        %s396 = scalar_select %p382, 0, 7
        %s397 = scalar_lea.vmem %s343, %s396
        %v398 = vld [vmem:[%s397] sm:$0x1]
        %v399 = vunpack.c.l.bf16 %v398
        %v400 = vpack.c.bf16 %v395, %v395
        %v402 = vlaneseq
        %v403 = vshrl.u32 %v402, 7
        %v404 = vsub.s32 0, %v403
        %v405 = vrot.slane %v394, %v404
        %v411 = vunpack.c.l.b16 %v390
        %v412 = vunpack.c.l.b16 %v391
        %v413 = vunpack.c.l.b16 %v392
        %v414 = vunpack.c.l.b16 %v393
        %v415 = vpack.c.b16 %v412, %v411
        %v416 = vpack.c.b16 %v414, %v413
        %vm419 = vcmask 261120
        %v421 = vsel %vm419, %v400, 0
        %423 = vmatprep.subr.bf16.mxu0 0
        %424 = vmatpush1.bf16.msra.mxu0 0
        %425 = vmatprep.subr.bf16.mxu0 0
        %426 = vmatpush1.bf16.msra.mxu0 0
        %427 = vmatprep.subr.bf16.mxu0 0
        %428 = vmatpush1.bf16.msra.mxu0 0
        %429 = vmatprep.subr.bf16.mxu0 0
        %430 = vmatpush1.bf16.msra.mxu0 0
        %431 = vmatprep.subr.bf16.mxu0 0
        %432 = vmatpush1.bf16.msra.mxu0 0
        %433 = vmatprep.subr.bf16.mxu0 0
        %434 = vmatpush1.bf16.msra.mxu0 0
        %435 = vmatprep.subr.bf16.mxu0 0
        %436 = vmatpush1.bf16.msra.mxu0 %v416
        %437 = vmatprep.subr.bf16.mxu0 0
        %438 = vmatpush1.bf16.msra.mxu0 %v415
        %439 = vmatprep.subr.bf16.mxu0 0
        %440 = vmatpush2.bf16.msra.mxu0 0
        %441 = vmatprep.subr.bf16.mxu0 0
        %442 = vmatpush2.bf16.msra.mxu0 0
        %443 = vmatprep.subr.bf16.mxu0 0
        %444 = vmatpush2.bf16.msra.mxu0 0
        %445 = vmatprep.subr.bf16.mxu0 0
        %446 = vmatpush2.bf16.msra.mxu0 0
        %447 = vmatprep.subr.bf16.mxu0 0
        %448 = vmatpush2.bf16.msra.mxu0 0
        %449 = vmatprep.subr.bf16.mxu0 0
        %450 = vmatpush2.bf16.msra.mxu0 0
        %451 = vmatprep.subr.bf16.mxu0 0
        %452 = vmatpush2.bf16.msra.mxu0 0
        %453 = vmatprep.subr.bf16.mxu0 0
        %454 = vmatpush2.bf16.msra.mxu0 0
        %455 = vmatprep.mubr.bf16.mxu0 0
        %456 = vmatmul.mubr.bf16.gmra.mxu0 %v421
        %v457 = vpop.f32.mrf.mxu0
        %v458 = vadd.f32 %v405, %v457
        %v459 = vpop.f32.mrf.mxu0
        %v460 = vpop.f32.mrf.mxu0
        %v461 = vpop.f32.mrf.mxu0
        %462 = vdwg.mxu0
        %v463 = vadd.f32 %v399, %v458
        %v464 = vxor.u32 %v463, 2147483648
        %v465 = vmul.f32 %v464, 1.442695
        %v466 = vpow.pop %v465
        %v467 = vadd.f32 %v466, 1.0
        %v468 = vrcp.pop %v467
        %v469 = vmul.f32 1.0, %v468
        %v472 = vunpack.c.l.s4 1983009808
        %v473 = vunpack.c.0.s8 %v472
        %v474 = vlaneseq
        %v475 = vshrl.u32 %v474, 7
        %v476 = vsub.s32 %v473, %v475
        %v477 = vrot.slane %v458, %v476
        %478 = vrot.lane.b32.xlu0 %v477, 64
        %v479 = vpop.permute.xlu0 %478
        %v481 = vmul.f32 %v469, %v479
        %483 = vrot.lane.b32.xlu0 %v481, 64
        %v484 = vpop.permute.xlu0 %483
        %v486 = vadd.f32 %v399, %v484
        %v487 = vtanh.pop %v486
        %v488 = vsub.f32 1.0, %v469
        %490 = vrot.lane.b32.xlu0 %v487, 96
        %v491 = vpop.permute.xlu0 %490
        %v493 = vmul.f32 %v488, %v491
        %v496 = vunpack.c.l.s4 1983009808
        %v497 = vunpack.c.0.s8 %v496
        %v498 = vlaneseq
        %v499 = vshrl.u32 %v498, 7
        %v500 = vsub.s32 %v497, %v499
        %v501 = vrot.slane %v395, %v500
        %502 = vrot.lane.b32.xlu0 %v501, 32
        %v503 = vpop.permute.xlu0 %502
        %v505 = vmul.f32 %v469, %v503
        %v506 = vadd.f32 %v493, %v505
        %v507 = vpack.c.bf16 %v506, %v506
        %v510 = vunpack.c.l.s4 1966171168
        %v511 = vunpack.c.0.s8 %v510
        %v512 = vlaneseq
        %v513 = vshrl.u32 %v512, 7
        %v514 = vsub.s32 %v511, %v513
        %v515 = vrot.slane %v507, %v514
        %v517 = vunpack.c.l.s4 1966171168
        %v518 = vunpack.c.0.s8 %v517
        %v519 = vlaneseq
        %v520 = vshrl.u32 %v519, 7
        %v521 = vsub.s32 %v518, %v520
        %v522 = vrot.slane %v515, %v521
        %523 = vrot.lane.b32.xlu0 %v522, 96
        %v524 = vpop.permute.xlu0 %523
        %s526 = scalar_lea.vmem %s374, %s396
        %vm527 = vcmask 253952
        %528 = vst.msk [vmem:[%s526] sm:$0x1] %vm527, %v524
        %s529 = scalar_select %p382, 1, 6
        %s530 = scalar_lea.vmem %s343, %s529
        %v531 = vld [vmem:[%s530] sm:$0x1]
        %v532 = vunpack.c.l.bf16 %v531
        %533 = vrot.lane.b32.xlu0 %v507, 96
        %v534 = vpop.permute.xlu0 %533
        %v536 = vsel %vm419, %v534, 0
        %538 = vmatprep.subr.bf16.mxu0 0
        %539 = vmatpush1.bf16.msra.mxu0 0
        %540 = vmatprep.subr.bf16.mxu0 0
        %541 = vmatpush1.bf16.msra.mxu0 0
        %542 = vmatprep.subr.bf16.mxu0 0
        %543 = vmatpush1.bf16.msra.mxu0 0
        %544 = vmatprep.subr.bf16.mxu0 0
        %545 = vmatpush1.bf16.msra.mxu0 0
        %546 = vmatprep.subr.bf16.mxu0 0
        %547 = vmatpush1.bf16.msra.mxu0 0
        %548 = vmatprep.subr.bf16.mxu0 0
        %549 = vmatpush1.bf16.msra.mxu0 0
        %550 = vmatprep.subr.bf16.mxu0 0
        %551 = vmatpush1.bf16.msra.mxu0 %v416
        %552 = vmatprep.subr.bf16.mxu0 0
        %553 = vmatpush1.bf16.msra.mxu0 %v415
        %554 = vmatprep.subr.bf16.mxu0 0
        %555 = vmatpush2.bf16.msra.mxu0 0
        %556 = vmatprep.subr.bf16.mxu0 0
        %557 = vmatpush2.bf16.msra.mxu0 0
        %558 = vmatprep.subr.bf16.mxu0 0
        %559 = vmatpush2.bf16.msra.mxu0 0
        %560 = vmatprep.subr.bf16.mxu0 0
        %561 = vmatpush2.bf16.msra.mxu0 0
        %562 = vmatprep.subr.bf16.mxu0 0
        %563 = vmatpush2.bf16.msra.mxu0 0
        %564 = vmatprep.subr.bf16.mxu0 0
        %565 = vmatpush2.bf16.msra.mxu0 0
        %566 = vmatprep.subr.bf16.mxu0 0
        %567 = vmatpush2.bf16.msra.mxu0 0
        %568 = vmatprep.subr.bf16.mxu0 0
        %569 = vmatpush2.bf16.msra.mxu0 0
        %570 = vmatprep.mubr.bf16.mxu0 0
        %571 = vmatmul.mubr.bf16.gmra.mxu0 %v536
        %v572 = vpop.f32.mrf.mxu0
        %v573 = vadd.f32 %v405, %v572
        %v574 = vpop.f32.mrf.mxu0
        %v575 = vpop.f32.mrf.mxu0
        %v576 = vpop.f32.mrf.mxu0
        %577 = vdwg.mxu0
        %v578 = vadd.f32 %v532, %v573
        %v579 = vxor.u32 %v578, 2147483648
        %v580 = vmul.f32 %v579, 1.442695
        %v581 = vpow.pop %v580
        %v582 = vadd.f32 %v581, 1.0
        %v583 = vrcp.pop %v582
        %v584 = vmul.f32 1.0, %v583
        %v587 = vunpack.c.l.s4 1983009808
        %v588 = vunpack.c.0.s8 %v587
        %v589 = vlaneseq
        %v590 = vshrl.u32 %v589, 7
        %v591 = vsub.s32 %v588, %v590
        %v592 = vrot.slane %v573, %v591
        %593 = vrot.lane.b32.xlu0 %v592, 64
        %v594 = vpop.permute.xlu0 %593
        %v596 = vmul.f32 %v584, %v594
        %598 = vrot.lane.b32.xlu0 %v596, 64
        %v599 = vpop.permute.xlu0 %598
        %v601 = vadd.f32 %v532, %v599
        %v602 = vtanh.pop %v601
        %v603 = vsub.f32 1.0, %v584
        %605 = vrot.lane.b32.xlu0 %v602, 96
        %v606 = vpop.permute.xlu0 %605
        %v608 = vmul.f32 %v603, %v606
        %v609 = vmul.f32 %v584, %v506
        %v610 = vadd.f32 %v608, %v609
        %v611 = vpack.c.bf16 %v610, %v610
        %v614 = vunpack.c.l.s4 1966171168
        %v615 = vunpack.c.0.s8 %v614
        %v616 = vlaneseq
        %v617 = vshrl.u32 %v616, 7
        %v618 = vsub.s32 %v615, %v617
        %v619 = vrot.slane %v611, %v618
        %v621 = vunpack.c.l.s4 1966171168
        %v622 = vunpack.c.0.s8 %v621
        %v623 = vlaneseq
        %v624 = vshrl.u32 %v623, 7
        %v625 = vsub.s32 %v622, %v624
        %v626 = vrot.slane %v619, %v625
        %627 = vrot.lane.b32.xlu0 %v626, 96
        %v628 = vpop.permute.xlu0 %627
        %s630 = scalar_lea.vmem %s374, %s529
        %631 = vst.msk [vmem:[%s630] sm:$0x1] %vm527, %v628
        %s632 = scalar_select %p382, 2, 5
        %s633 = scalar_lea.vmem %s343, %s632
        %v634 = vld [vmem:[%s633] sm:$0x1]
        %v635 = vunpack.c.l.bf16 %v634
        %636 = vrot.lane.b32.xlu0 %v611, 96
        %v637 = vpop.permute.xlu0 %636
        %v639 = vsel %vm419, %v637, 0
        %641 = vmatprep.subr.bf16.mxu0 0
        %642 = vmatpush1.bf16.msra.mxu0 0
        %643 = vmatprep.subr.bf16.mxu0 0
        %644 = vmatpush1.bf16.msra.mxu0 0
        %645 = vmatprep.subr.bf16.mxu0 0
        %646 = vmatpush1.bf16.msra.mxu0 0
        %647 = vmatprep.subr.bf16.mxu0 0
        %648 = vmatpush1.bf16.msra.mxu0 0
        %649 = vmatprep.subr.bf16.mxu0 0
        %650 = vmatpush1.bf16.msra.mxu0 0
        %651 = vmatprep.subr.bf16.mxu0 0
        %652 = vmatpush1.bf16.msra.mxu0 0
        %653 = vmatprep.subr.bf16.mxu0 0
        %654 = vmatpush1.bf16.msra.mxu0 %v416
        %655 = vmatprep.subr.bf16.mxu0 0
        %656 = vmatpush1.bf16.msra.mxu0 %v415
        %657 = vmatprep.subr.bf16.mxu0 0
        %658 = vmatpush2.bf16.msra.mxu0 0
        %659 = vmatprep.subr.bf16.mxu0 0
        %660 = vmatpush2.bf16.msra.mxu0 0
        %661 = vmatprep.subr.bf16.mxu0 0
        %662 = vmatpush2.bf16.msra.mxu0 0
        %663 = vmatprep.subr.bf16.mxu0 0
        %664 = vmatpush2.bf16.msra.mxu0 0
        %665 = vmatprep.subr.bf16.mxu0 0
        %666 = vmatpush2.bf16.msra.mxu0 0
        %667 = vmatprep.subr.bf16.mxu0 0
        %668 = vmatpush2.bf16.msra.mxu0 0
        %669 = vmatprep.subr.bf16.mxu0 0
        %670 = vmatpush2.bf16.msra.mxu0 0
        %671 = vmatprep.subr.bf16.mxu0 0
        %672 = vmatpush2.bf16.msra.mxu0 0
        %673 = vmatprep.mubr.bf16.mxu0 0
        %674 = vmatmul.mubr.bf16.gmra.mxu0 %v639
        %v675 = vpop.f32.mrf.mxu0
        %v676 = vadd.f32 %v405, %v675
        %v677 = vpop.f32.mrf.mxu0
        %v678 = vpop.f32.mrf.mxu0
        %v679 = vpop.f32.mrf.mxu0
        %680 = vdwg.mxu0
        %v681 = vadd.f32 %v635, %v676
        %v682 = vxor.u32 %v681, 2147483648
        %v683 = vmul.f32 %v682, 1.442695
        %v684 = vpow.pop %v683
        %v685 = vadd.f32 %v684, 1.0
        %v686 = vrcp.pop %v685
        %v687 = vmul.f32 1.0, %v686
        %v690 = vunpack.c.l.s4 1983009808
        %v691 = vunpack.c.0.s8 %v690
        %v692 = vlaneseq
        %v693 = vshrl.u32 %v692, 7
        %v694 = vsub.s32 %v691, %v693
        %v695 = vrot.slane %v676, %v694
        %696 = vrot.lane.b32.xlu0 %v695, 64
        %v697 = vpop.permute.xlu0 %696
        %v699 = vmul.f32 %v687, %v697
        %701 = vrot.lane.b32.xlu0 %v699, 64
        %v702 = vpop.permute.xlu0 %701
        %v704 = vadd.f32 %v635, %v702
        %v705 = vtanh.pop %v704
        %v706 = vsub.f32 1.0, %v687
        %708 = vrot.lane.b32.xlu0 %v705, 96
        %v709 = vpop.permute.xlu0 %708
        %v711 = vmul.f32 %v706, %v709
        %v712 = vmul.f32 %v687, %v610
        %v713 = vadd.f32 %v711, %v712
        %v714 = vpack.c.bf16 %v713, %v713
        %v717 = vunpack.c.l.s4 1966171168
        %v718 = vunpack.c.0.s8 %v717
        %v719 = vlaneseq
        %v720 = vshrl.u32 %v719, 7
        %v721 = vsub.s32 %v718, %v720
        %v722 = vrot.slane %v714, %v721
        %v724 = vunpack.c.l.s4 1966171168
        %v725 = vunpack.c.0.s8 %v724
        %v726 = vlaneseq
        %v727 = vshrl.u32 %v726, 7
        %v728 = vsub.s32 %v725, %v727
        %v729 = vrot.slane %v722, %v728
        %730 = vrot.lane.b32.xlu0 %v729, 96
        %v731 = vpop.permute.xlu0 %730
        %s733 = scalar_lea.vmem %s374, %s632
        %734 = vst.msk [vmem:[%s733] sm:$0x1] %vm527, %v731
        %s735 = scalar_select %p382, 3, 4
        %s736 = scalar_lea.vmem %s343, %s735
        %v737 = vld [vmem:[%s736] sm:$0x1]
        %v738 = vunpack.c.l.bf16 %v737
        %739 = vrot.lane.b32.xlu0 %v714, 96
        %v740 = vpop.permute.xlu0 %739
        %v742 = vsel %vm419, %v740, 0
        %744 = vmatprep.subr.bf16.mxu0 0
        %745 = vmatpush1.bf16.msra.mxu0 0
        %746 = vmatprep.subr.bf16.mxu0 0
        %747 = vmatpush1.bf16.msra.mxu0 0
        %748 = vmatprep.subr.bf16.mxu0 0
        %749 = vmatpush1.bf16.msra.mxu0 0
        %750 = vmatprep.subr.bf16.mxu0 0
        %751 = vmatpush1.bf16.msra.mxu0 0
        %752 = vmatprep.subr.bf16.mxu0 0
        %753 = vmatpush1.bf16.msra.mxu0 0
        %754 = vmatprep.subr.bf16.mxu0 0
        %755 = vmatpush1.bf16.msra.mxu0 0
        %756 = vmatprep.subr.bf16.mxu0 0
        %757 = vmatpush1.bf16.msra.mxu0 %v416
        %758 = vmatprep.subr.bf16.mxu0 0
        %759 = vmatpush1.bf16.msra.mxu0 %v415
        %760 = vmatprep.subr.bf16.mxu0 0
        %761 = vmatpush2.bf16.msra.mxu0 0
        %762 = vmatprep.subr.bf16.mxu0 0
        %763 = vmatpush2.bf16.msra.mxu0 0
        %764 = vmatprep.subr.bf16.mxu0 0
        %765 = vmatpush2.bf16.msra.mxu0 0
        %766 = vmatprep.subr.bf16.mxu0 0
        %767 = vmatpush2.bf16.msra.mxu0 0
        %768 = vmatprep.subr.bf16.mxu0 0
        %769 = vmatpush2.bf16.msra.mxu0 0
        %770 = vmatprep.subr.bf16.mxu0 0
        %771 = vmatpush2.bf16.msra.mxu0 0
        %772 = vmatprep.subr.bf16.mxu0 0
        %773 = vmatpush2.bf16.msra.mxu0 0
        %774 = vmatprep.subr.bf16.mxu0 0
        %775 = vmatpush2.bf16.msra.mxu0 0
        %776 = vmatprep.mubr.bf16.mxu0 0
        %777 = vmatmul.mubr.bf16.gmra.mxu0 %v742
        %v778 = vpop.f32.mrf.mxu0
        %v779 = vadd.f32 %v405, %v778
        %v780 = vpop.f32.mrf.mxu0
        %v781 = vpop.f32.mrf.mxu0
        %v782 = vpop.f32.mrf.mxu0
        %783 = vdwg.mxu0
        %v784 = vadd.f32 %v738, %v779
        %v785 = vxor.u32 %v784, 2147483648
        %v786 = vmul.f32 %v785, 1.442695
        %v787 = vpow.pop %v786
        %v788 = vadd.f32 %v787, 1.0
        %v789 = vrcp.pop %v788
        %v790 = vmul.f32 1.0, %v789
        %v793 = vunpack.c.l.s4 1983009808
        %v794 = vunpack.c.0.s8 %v793
        %v795 = vlaneseq
        %v796 = vshrl.u32 %v795, 7
        %v797 = vsub.s32 %v794, %v796
        %v798 = vrot.slane %v779, %v797
        %799 = vrot.lane.b32.xlu0 %v798, 64
        %v800 = vpop.permute.xlu0 %799
        %v802 = vmul.f32 %v790, %v800
        %804 = vrot.lane.b32.xlu0 %v802, 64
        %v805 = vpop.permute.xlu0 %804
        %v807 = vadd.f32 %v738, %v805
        %v808 = vtanh.pop %v807
        %v809 = vsub.f32 1.0, %v790
        %811 = vrot.lane.b32.xlu0 %v808, 96
        %v812 = vpop.permute.xlu0 %811
        %v814 = vmul.f32 %v809, %v812
        %v815 = vmul.f32 %v790, %v713
        %v816 = vadd.f32 %v814, %v815
        %v817 = vpack.c.bf16 %v816, %v816
        %v820 = vunpack.c.l.s4 1966171168
        %v821 = vunpack.c.0.s8 %v820
        %v822 = vlaneseq
        %v823 = vshrl.u32 %v822, 7
        %v824 = vsub.s32 %v821, %v823
        %v825 = vrot.slane %v817, %v824
        %v827 = vunpack.c.l.s4 1966171168
        %v828 = vunpack.c.0.s8 %v827
        %v829 = vlaneseq
        %v830 = vshrl.u32 %v829, 7
        %v831 = vsub.s32 %v828, %v830
        %v832 = vrot.slane %v825, %v831
        %833 = vrot.lane.b32.xlu0 %v832, 96
        %v834 = vpop.permute.xlu0 %833
        %s836 = scalar_lea.vmem %s374, %s735
        %837 = vst.msk [vmem:[%s836] sm:$0x1] %vm527, %v834
        %s838 = scalar_select %p382, 4, 3
        %s839 = scalar_lea.vmem %s343, %s838
        %v840 = vld [vmem:[%s839] sm:$0x1]
        %v841 = vunpack.c.l.bf16 %v840
        %842 = vrot.lane.b32.xlu0 %v817, 96
        %v843 = vpop.permute.xlu0 %842
        %v845 = vsel %vm419, %v843, 0
        %847 = vmatprep.subr.bf16.mxu0 0
        %848 = vmatpush1.bf16.msra.mxu0 0
        %849 = vmatprep.subr.bf16.mxu0 0
        %850 = vmatpush1.bf16.msra.mxu0 0
        %851 = vmatprep.subr.bf16.mxu0 0
        %852 = vmatpush1.bf16.msra.mxu0 0
        %853 = vmatprep.subr.bf16.mxu0 0
        %854 = vmatpush1.bf16.msra.mxu0 0
        %855 = vmatprep.subr.bf16.mxu0 0
        %856 = vmatpush1.bf16.msra.mxu0 0
        %857 = vmatprep.subr.bf16.mxu0 0
        %858 = vmatpush1.bf16.msra.mxu0 0
        %859 = vmatprep.subr.bf16.mxu0 0
        %860 = vmatpush1.bf16.msra.mxu0 %v416
        %861 = vmatprep.subr.bf16.mxu0 0
        %862 = vmatpush1.bf16.msra.mxu0 %v415
        %863 = vmatprep.subr.bf16.mxu0 0
        %864 = vmatpush2.bf16.msra.mxu0 0
        %865 = vmatprep.subr.bf16.mxu0 0
        %866 = vmatpush2.bf16.msra.mxu0 0
        %867 = vmatprep.subr.bf16.mxu0 0
        %868 = vmatpush2.bf16.msra.mxu0 0
        %869 = vmatprep.subr.bf16.mxu0 0
        %870 = vmatpush2.bf16.msra.mxu0 0
        %871 = vmatprep.subr.bf16.mxu0 0
        %872 = vmatpush2.bf16.msra.mxu0 0
        %873 = vmatprep.subr.bf16.mxu0 0
        %874 = vmatpush2.bf16.msra.mxu0 0
        %875 = vmatprep.subr.bf16.mxu0 0
        %876 = vmatpush2.bf16.msra.mxu0 0
        %877 = vmatprep.subr.bf16.mxu0 0
        %878 = vmatpush2.bf16.msra.mxu0 0
        %879 = vmatprep.mubr.bf16.mxu0 0
        %880 = vmatmul.mubr.bf16.gmra.mxu0 %v845
        %v881 = vpop.f32.mrf.mxu0
        %v882 = vadd.f32 %v405, %v881
        %v883 = vpop.f32.mrf.mxu0
        %v884 = vpop.f32.mrf.mxu0
        %v885 = vpop.f32.mrf.mxu0
        %886 = vdwg.mxu0
        %v887 = vadd.f32 %v841, %v882
        %v888 = vxor.u32 %v887, 2147483648
        %v889 = vmul.f32 %v888, 1.442695
        %v890 = vpow.pop %v889
        %v891 = vadd.f32 %v890, 1.0
        %v892 = vrcp.pop %v891
        %v893 = vmul.f32 1.0, %v892
        %v896 = vunpack.c.l.s4 1983009808
        %v897 = vunpack.c.0.s8 %v896
        %v898 = vlaneseq
        %v899 = vshrl.u32 %v898, 7
        %v900 = vsub.s32 %v897, %v899
        %v901 = vrot.slane %v882, %v900
        %902 = vrot.lane.b32.xlu0 %v901, 64
        %v903 = vpop.permute.xlu0 %902
        %v905 = vmul.f32 %v893, %v903
        %907 = vrot.lane.b32.xlu0 %v905, 64
        %v908 = vpop.permute.xlu0 %907
        %v910 = vadd.f32 %v841, %v908
        %v911 = vtanh.pop %v910
        %v912 = vsub.f32 1.0, %v893
        %914 = vrot.lane.b32.xlu0 %v911, 96
        %v915 = vpop.permute.xlu0 %914
        %v917 = vmul.f32 %v912, %v915
        %v918 = vmul.f32 %v893, %v816
        %v919 = vadd.f32 %v917, %v918
        %v920 = vpack.c.bf16 %v919, %v919
        %v923 = vunpack.c.l.s4 1966171168
        %v924 = vunpack.c.0.s8 %v923
        %v925 = vlaneseq
        %v926 = vshrl.u32 %v925, 7
        %v927 = vsub.s32 %v924, %v926
        %v928 = vrot.slane %v920, %v927
        %v930 = vunpack.c.l.s4 1966171168
        %v931 = vunpack.c.0.s8 %v930
        %v932 = vlaneseq
        %v933 = vshrl.u32 %v932, 7
        %v934 = vsub.s32 %v931, %v933
        %v935 = vrot.slane %v928, %v934
        %936 = vrot.lane.b32.xlu0 %v935, 96
        %v937 = vpop.permute.xlu0 %936
        %s939 = scalar_lea.vmem %s374, %s838
        %940 = vst.msk [vmem:[%s939] sm:$0x1] %vm527, %v937
        %s941 = scalar_select %p382, 5, 2
        %s942 = scalar_lea.vmem %s343, %s941
        %v943 = vld [vmem:[%s942] sm:$0x1]
        %v944 = vunpack.c.l.bf16 %v943
        %945 = vrot.lane.b32.xlu0 %v920, 96
        %v946 = vpop.permute.xlu0 %945
        %v948 = vsel %vm419, %v946, 0
        %950 = vmatprep.subr.bf16.mxu0 0
        %951 = vmatpush1.bf16.msra.mxu0 0
        %952 = vmatprep.subr.bf16.mxu0 0
        %953 = vmatpush1.bf16.msra.mxu0 0
        %954 = vmatprep.subr.bf16.mxu0 0
        %955 = vmatpush1.bf16.msra.mxu0 0
        %956 = vmatprep.subr.bf16.mxu0 0
        %957 = vmatpush1.bf16.msra.mxu0 0
        %958 = vmatprep.subr.bf16.mxu0 0
        %959 = vmatpush1.bf16.msra.mxu0 0
        %960 = vmatprep.subr.bf16.mxu0 0
        %961 = vmatpush1.bf16.msra.mxu0 0
        %962 = vmatprep.subr.bf16.mxu0 0
        %963 = vmatpush1.bf16.msra.mxu0 %v416
        %964 = vmatprep.subr.bf16.mxu0 0
        %965 = vmatpush1.bf16.msra.mxu0 %v415
        %966 = vmatprep.subr.bf16.mxu0 0
        %967 = vmatpush2.bf16.msra.mxu0 0
        %968 = vmatprep.subr.bf16.mxu0 0
        %969 = vmatpush2.bf16.msra.mxu0 0
        %970 = vmatprep.subr.bf16.mxu0 0
        %971 = vmatpush2.bf16.msra.mxu0 0
        %972 = vmatprep.subr.bf16.mxu0 0
        %973 = vmatpush2.bf16.msra.mxu0 0
        %974 = vmatprep.subr.bf16.mxu0 0
        %975 = vmatpush2.bf16.msra.mxu0 0
        %976 = vmatprep.subr.bf16.mxu0 0
        %977 = vmatpush2.bf16.msra.mxu0 0
        %978 = vmatprep.subr.bf16.mxu0 0
        %979 = vmatpush2.bf16.msra.mxu0 0
        %980 = vmatprep.subr.bf16.mxu0 0
        %981 = vmatpush2.bf16.msra.mxu0 0
        %982 = vmatprep.mubr.bf16.mxu0 0
        %983 = vmatmul.mubr.bf16.gmra.mxu0 %v948
        %v984 = vpop.f32.mrf.mxu0
        %v985 = vadd.f32 %v405, %v984
        %v986 = vpop.f32.mrf.mxu0
        %v987 = vpop.f32.mrf.mxu0
        %v988 = vpop.f32.mrf.mxu0
        %989 = vdwg.mxu0
        %v990 = vadd.f32 %v944, %v985
        %v991 = vxor.u32 %v990, 2147483648
        %v992 = vmul.f32 %v991, 1.442695
        %v993 = vpow.pop %v992
        %v994 = vadd.f32 %v993, 1.0
        %v995 = vrcp.pop %v994
        %v996 = vmul.f32 1.0, %v995
        %v999 = vunpack.c.l.s4 1983009808
        %v1000 = vunpack.c.0.s8 %v999
        %v1001 = vlaneseq
        %v1002 = vshrl.u32 %v1001, 7
        %v1003 = vsub.s32 %v1000, %v1002
        %v1004 = vrot.slane %v985, %v1003
        %1005 = vrot.lane.b32.xlu0 %v1004, 64
        %v1006 = vpop.permute.xlu0 %1005
        %v1008 = vmul.f32 %v996, %v1006
        %1010 = vrot.lane.b32.xlu0 %v1008, 64
        %v1011 = vpop.permute.xlu0 %1010
        %v1013 = vadd.f32 %v944, %v1011
        %v1014 = vtanh.pop %v1013
        %v1015 = vsub.f32 1.0, %v996
        %1017 = vrot.lane.b32.xlu0 %v1014, 96
        %v1018 = vpop.permute.xlu0 %1017
        %v1020 = vmul.f32 %v1015, %v1018
        %v1021 = vmul.f32 %v996, %v919
        %v1022 = vadd.f32 %v1020, %v1021
        %v1023 = vpack.c.bf16 %v1022, %v1022
        %v1026 = vunpack.c.l.s4 1966171168
        %v1027 = vunpack.c.0.s8 %v1026
        %v1028 = vlaneseq
        %v1029 = vshrl.u32 %v1028, 7
        %v1030 = vsub.s32 %v1027, %v1029
        %v1031 = vrot.slane %v1023, %v1030
        %v1033 = vunpack.c.l.s4 1966171168
        %v1034 = vunpack.c.0.s8 %v1033
        %v1035 = vlaneseq
        %v1036 = vshrl.u32 %v1035, 7
        %v1037 = vsub.s32 %v1034, %v1036
        %v1038 = vrot.slane %v1031, %v1037
        %1039 = vrot.lane.b32.xlu0 %v1038, 96
        %v1040 = vpop.permute.xlu0 %1039
        %s1042 = scalar_lea.vmem %s374, %s941
        %1043 = vst.msk [vmem:[%s1042] sm:$0x1] %vm527, %v1040
        %s1044 = scalar_select %p382, 6, 1
        %s1045 = scalar_lea.vmem %s343, %s1044
        %v1046 = vld [vmem:[%s1045] sm:$0x1]
        %v1047 = vunpack.c.l.bf16 %v1046
        %1048 = vrot.lane.b32.xlu0 %v1023, 96
        %v1049 = vpop.permute.xlu0 %1048
        %v1051 = vsel %vm419, %v1049, 0
        %1053 = vmatprep.subr.bf16.mxu0 0
        %1054 = vmatpush1.bf16.msra.mxu0 0
        %1055 = vmatprep.subr.bf16.mxu0 0
        %1056 = vmatpush1.bf16.msra.mxu0 0
        %1057 = vmatprep.subr.bf16.mxu0 0
        %1058 = vmatpush1.bf16.msra.mxu0 0
        %1059 = vmatprep.subr.bf16.mxu0 0
        %1060 = vmatpush1.bf16.msra.mxu0 0
        %1061 = vmatprep.subr.bf16.mxu0 0
        %1062 = vmatpush1.bf16.msra.mxu0 0
        %1063 = vmatprep.subr.bf16.mxu0 0
        %1064 = vmatpush1.bf16.msra.mxu0 0
        %1065 = vmatprep.subr.bf16.mxu0 0
        %1066 = vmatpush1.bf16.msra.mxu0 %v416
        %1067 = vmatprep.subr.bf16.mxu0 0
        %1068 = vmatpush1.bf16.msra.mxu0 %v415
        %1069 = vmatprep.subr.bf16.mxu0 0
        %1070 = vmatpush2.bf16.msra.mxu0 0
        %1071 = vmatprep.subr.bf16.mxu0 0
        %1072 = vmatpush2.bf16.msra.mxu0 0
        %1073 = vmatprep.subr.bf16.mxu0 0
        %1074 = vmatpush2.bf16.msra.mxu0 0
        %1075 = vmatprep.subr.bf16.mxu0 0
        %1076 = vmatpush2.bf16.msra.mxu0 0
        %1077 = vmatprep.subr.bf16.mxu0 0
        %1078 = vmatpush2.bf16.msra.mxu0 0
        %1079 = vmatprep.subr.bf16.mxu0 0
        %1080 = vmatpush2.bf16.msra.mxu0 0
        %1081 = vmatprep.subr.bf16.mxu0 0
        %1082 = vmatpush2.bf16.msra.mxu0 0
        %1083 = vmatprep.subr.bf16.mxu0 0
        %1084 = vmatpush2.bf16.msra.mxu0 0
        %1085 = vmatprep.mubr.bf16.mxu0 0
        %1086 = vmatmul.mubr.bf16.gmra.mxu0 %v1051
        %v1087 = vpop.f32.mrf.mxu0
        %v1088 = vadd.f32 %v405, %v1087
        %v1089 = vpop.f32.mrf.mxu0
        %v1090 = vpop.f32.mrf.mxu0
        %v1091 = vpop.f32.mrf.mxu0
        %1092 = vdwg.mxu0
        %v1093 = vadd.f32 %v1047, %v1088
        %v1094 = vxor.u32 %v1093, 2147483648
        %v1095 = vmul.f32 %v1094, 1.442695
        %v1096 = vpow.pop %v1095
        %v1097 = vadd.f32 %v1096, 1.0
        %v1098 = vrcp.pop %v1097
        %v1099 = vmul.f32 1.0, %v1098
        %v1102 = vunpack.c.l.s4 1983009808
        %v1103 = vunpack.c.0.s8 %v1102
        %v1104 = vlaneseq
        %v1105 = vshrl.u32 %v1104, 7
        %v1106 = vsub.s32 %v1103, %v1105
        %v1107 = vrot.slane %v1088, %v1106
        %1108 = vrot.lane.b32.xlu0 %v1107, 64
        %v1109 = vpop.permute.xlu0 %1108
        %v1111 = vmul.f32 %v1099, %v1109
        %1113 = vrot.lane.b32.xlu0 %v1111, 64
        %v1114 = vpop.permute.xlu0 %1113
        %v1116 = vadd.f32 %v1047, %v1114
        %v1117 = vtanh.pop %v1116
        %v1118 = vsub.f32 1.0, %v1099
        %1120 = vrot.lane.b32.xlu0 %v1117, 96
        %v1121 = vpop.permute.xlu0 %1120
        %v1123 = vmul.f32 %v1118, %v1121
        %v1124 = vmul.f32 %v1099, %v1022
        %v1125 = vadd.f32 %v1123, %v1124
        %v1126 = vpack.c.bf16 %v1125, %v1125
        %v1129 = vunpack.c.l.s4 1966171168
        %v1130 = vunpack.c.0.s8 %v1129
        %v1131 = vlaneseq
        %v1132 = vshrl.u32 %v1131, 7
        %v1133 = vsub.s32 %v1130, %v1132
        %v1134 = vrot.slane %v1126, %v1133
        %v1136 = vunpack.c.l.s4 1966171168
        %v1137 = vunpack.c.0.s8 %v1136
        %v1138 = vlaneseq
        %v1139 = vshrl.u32 %v1138, 7
        %v1140 = vsub.s32 %v1137, %v1139
        %v1141 = vrot.slane %v1134, %v1140
        %1142 = vrot.lane.b32.xlu0 %v1141, 96
        %v1143 = vpop.permute.xlu0 %1142
        %s1145 = scalar_lea.vmem %s374, %s1044
        %1146 = vst.msk [vmem:[%s1145] sm:$0x1] %vm527, %v1143
        %s1147 = scalar_select %p382, 7, 0
        %s1148 = scalar_lea.vmem %s343, %s1147
        %v1149 = vld [vmem:[%s1148] sm:$0x1]
        %v1150 = vunpack.c.l.bf16 %v1149
        %1151 = vrot.lane.b32.xlu0 %v1126, 96
        %v1152 = vpop.permute.xlu0 %1151
        %v1154 = vsel %vm419, %v1152, 0
        %1156 = vmatprep.subr.bf16.mxu0 0
        %1157 = vmatpush1.bf16.msra.mxu0 0
        %1158 = vmatprep.subr.bf16.mxu0 0
        %1159 = vmatpush1.bf16.msra.mxu0 0
        %1160 = vmatprep.subr.bf16.mxu0 0
        %1161 = vmatpush1.bf16.msra.mxu0 0
        %1162 = vmatprep.subr.bf16.mxu0 0
        %1163 = vmatpush1.bf16.msra.mxu0 0
        %1164 = vmatprep.subr.bf16.mxu0 0
        %1165 = vmatpush1.bf16.msra.mxu0 0
        %1166 = vmatprep.subr.bf16.mxu0 0
        %1167 = vmatpush1.bf16.msra.mxu0 0
        %1168 = vmatprep.subr.bf16.mxu0 0
        %1169 = vmatpush1.bf16.msra.mxu0 %v416
        %1170 = vmatprep.subr.bf16.mxu0 0
        %1171 = vmatpush1.bf16.msra.mxu0 %v415
        %1172 = vmatprep.subr.bf16.mxu0 0
        %1173 = vmatpush2.bf16.msra.mxu0 0
        %1174 = vmatprep.subr.bf16.mxu0 0
        %1175 = vmatpush2.bf16.msra.mxu0 0
        %1176 = vmatprep.subr.bf16.mxu0 0
        %1177 = vmatpush2.bf16.msra.mxu0 0
        %1178 = vmatprep.subr.bf16.mxu0 0
        %1179 = vmatpush2.bf16.msra.mxu0 0
        %1180 = vmatprep.subr.bf16.mxu0 0
        %1181 = vmatpush2.bf16.msra.mxu0 0
        %1182 = vmatprep.subr.bf16.mxu0 0
        %1183 = vmatpush2.bf16.msra.mxu0 0
        %1184 = vmatprep.subr.bf16.mxu0 0
        %1185 = vmatpush2.bf16.msra.mxu0 0
        %1186 = vmatprep.subr.bf16.mxu0 0
        %1187 = vmatpush2.bf16.msra.mxu0 0
        %1188 = vmatprep.mubr.bf16.mxu0 0
        %1189 = vmatmul.mubr.bf16.gmra.mxu0 %v1154
        %v1190 = vpop.f32.mrf.mxu0
        %v1191 = vadd.f32 %v405, %v1190
        %v1192 = vpop.f32.mrf.mxu0
        %v1193 = vpop.f32.mrf.mxu0
        %v1194 = vpop.f32.mrf.mxu0
        %1195 = vdwg.mxu0
        %v1196 = vadd.f32 %v1150, %v1191
        %v1197 = vxor.u32 %v1196, 2147483648
        %v1198 = vmul.f32 %v1197, 1.442695
        %v1199 = vpow.pop %v1198
        %v1200 = vadd.f32 %v1199, 1.0
        %v1201 = vrcp.pop %v1200
        %v1202 = vmul.f32 1.0, %v1201
        %v1205 = vunpack.c.l.s4 1983009808
        %v1206 = vunpack.c.0.s8 %v1205
        %v1207 = vlaneseq
        %v1208 = vshrl.u32 %v1207, 7
        %v1209 = vsub.s32 %v1206, %v1208
        %v1210 = vrot.slane %v1191, %v1209
        %1211 = vrot.lane.b32.xlu0 %v1210, 64
        %v1212 = vpop.permute.xlu0 %1211
        %v1214 = vmul.f32 %v1202, %v1212
        %1216 = vrot.lane.b32.xlu0 %v1214, 64
        %v1217 = vpop.permute.xlu0 %1216
        %v1219 = vadd.f32 %v1150, %v1217
        %v1220 = vtanh.pop %v1219
        %v1221 = vsub.f32 1.0, %v1202
        %1223 = vrot.lane.b32.xlu0 %v1220, 96
        %v1224 = vpop.permute.xlu0 %1223
        %v1226 = vmul.f32 %v1221, %v1224
        %v1227 = vmul.f32 %v1202, %v1125
        %v1228 = vadd.f32 %v1226, %v1227
        %v1229 = vpack.c.bf16 %v1228, %v1228
        %v1232 = vunpack.c.l.s4 1966171168
        %v1233 = vunpack.c.0.s8 %v1232
        %v1234 = vlaneseq
        %v1235 = vshrl.u32 %v1234, 7
        %v1236 = vsub.s32 %v1233, %v1235
        %v1237 = vrot.slane %v1229, %v1236
        %v1239 = vunpack.c.l.s4 1966171168
        %v1240 = vunpack.c.0.s8 %v1239
        %v1241 = vlaneseq
        %v1242 = vshrl.u32 %v1241, 7
        %v1243 = vsub.s32 %v1240, %v1242
        %v1244 = vrot.slane %v1237, %v1243
        %1245 = vrot.lane.b32.xlu0 %v1244, 96
        %v1246 = vpop.permute.xlu0 %1245
        %s1248 = scalar_lea.vmem %s374, %s1147
        %1249 = vst.msk [vmem:[%s1248] sm:$0x1] %vm527, %v1246
        %v1252 = vunpack.c.l.s4 1983009808
        %v1253 = vunpack.c.0.s8 %v1252
        %v1254 = vlaneseq
        %v1255 = vshrl.u32 %v1254, 7
        %v1256 = vsub.s32 %v1253, %v1255
        %v1257 = vrot.slane %v1228, %v1256
        %1258 = vrot.lane.b32.xlu0 %v1257, 96
        %v1259 = vpop.permute.xlu0 %1258
        %vm1261 = vcmask 254976
        %1262 = vst.msk [vmem:[#allocation2] sm:$0x3] %vm1261, %v1259
        // Predicated region
        $region41: #{basic_attn_forward.4} parent=35 // pred_check
          %p1263 = pneg %p383
        $region42: #{basic_attn_forward.4} parent=35 // pred_check_branch
          %1265 = sbr.rel (%p1263) target = $region44
        $region43: #{basic_attn_forward.4} parent=35 // pred_region
          %1266 = vst.msk [vmem:[%s330] sm:$0x3] %vm1261, %v1259
        $region44: #{basic_attn_forward.4} parent=35 // pred_fallthru
          _
        %s1267 = ssub.s32 1, %s24
        %s1268 = smul.u32 %s1267, %s25
        %s1269 = ssub.s32 0, %s25
        %s1270 = smul.u32 %s24, %s1269
        %s1271 = sadd.s32 %s1268, %s1270
        %s1272 = smul.u32 8, %s1271
        %p1273 = scmp.lt.s32.totalorder %s24, 1
        %s1274 = scalar_select %p1273, %s24, 1
        %p1275 = scmp.lt.s32.totalorder %s1272, 7
        %s1276 = scalar_select %p1275, %s1272, 7
        %s1277 = smul.addr %s1274, 8
        %s1278 = sadd.s32 %s1276, %s1277
        %s1279 = scalar_lea.vmem %s4, %s1278
        %s1280 = sand.u32 %s194, 1
        %s1281 = scalar_lea.sflag [#allocation4], %s1280
        %s1282 = sand.u32 %s194, 1
        %s1283 = smul.addr %s1282, 2
        %s1284 = scalar_lea.vmem [#allocation3], %s1283
        // Predicated region
        $region45: #{basic_attn_forward.4} parent=35 // pred_check
          %p1285 = pneg %p178
        $region46: #{basic_attn_forward.4} parent=35 // pred_check_branch
          %1287 = sbr.rel (%p1285) target = $region48
        $region47: #{basic_attn_forward.4} parent=35 // pred_region
          %s1288 = ssub.s32 1, %s24
          %s1289 = smul.u32 %s1288, %s25
          %s1290 = ssub.s32 0, %s25
          %s1291 = smul.u32 %s24, %s1290
          %s1292 = sadd.s32 %s1289, %s1291
          %s1293 = smul.u32 8, %s1292
        $region48: #{basic_attn_forward.4} parent=35 // pred_fallthru
          _
        // Predicated region
        $region49: #{basic_attn_forward.4} parent=35 // pred_check
          %p1294 = pneg %p204
        $region50: #{basic_attn_forward.4} parent=35 // pred_check_branch
          %1296 = sbr.rel (%p1294) target = $region52
        $region51: #{basic_attn_forward.4} parent=35 // pred_region
          %s1298 = ssub.s32 32, 32
          %1299 = vsyncadd %s1281, %s1298
          %s1300 = smul.addr %s24, 32
          %s1301 = scalar_lea.hbm %s5, %s1300
          %s1303 = sshll.u32 %s1284, 4
          %s1304 = int_to_ptr.vmem [resolvable:$true] %s1303
          %1306 = dma.vmem_to_hbm [thread:$0]  %s1304, 32, %s1301, %s1281
        $region52: #{basic_attn_forward.4} parent=35 // pred_fallthru
          _
      $region36: #{basic_attn_forward.4} parent=5 // pred_fallthru
        _
      %p1307 = scmp.le.s32.totalorder 2, %s15
      // Predicated region
      $region53: #{basic_attn_forward.4} parent=5 // pred_check
        %p1308 = pneg %p1307
      $region54: #{basic_attn_forward.4} parent=5 // pred_check_branch
        %1310 = sbr.rel (%p1308) target = $region56
      $region55: #{basic_attn_forward.4} parent=5 // pred_region
        %s1311 = ssub.s32 %s15, 2
        // Predicated region
        $region57: #{basic_attn_forward.4} parent=55 // pred_check
          %p1312 = pneg %p184
        $region58: #{basic_attn_forward.4} parent=55 // pred_check_branch
          %1314 = sbr.rel (%p1312) target = $region60
        $region59: #{basic_attn_forward.4} parent=55 // pred_region
          %s1315 = ssub.s32 1, %s26
          %s1316 = smul.u32 %s1315, %s27
          %s1317 = ssub.s32 0, %s27
          %s1318 = smul.u32 %s26, %s1317
          %s1319 = sadd.s32 %s1316, %s1318
          %s1320 = smul.u32 8, %s1319
          %p1321 = scmp.lt.s32.totalorder %s26, 1
          %s1322 = scalar_select %p1321, %s26, 1
          %p1323 = scmp.lt.s32.totalorder %s1320, 7
          %s1324 = scalar_select %p1323, %s1320, 7
          %s1325 = smul.addr %s1322, 8
          %s1326 = sadd.s32 %s1324, %s1325
          %s1327 = scalar_lea.vmem %s4, %s1326
        $region60: #{basic_attn_forward.4} parent=55 // pred_fallthru
          _
        // Predicated region
        $region61: #{basic_attn_forward.4} parent=55 // pred_check
          %p1328 = pneg %p210
        $region62: #{basic_attn_forward.4} parent=55 // pred_check_branch
          %1330 = sbr.rel (%p1328) target = $region64
        $region63: #{basic_attn_forward.4} parent=55 // pred_region
          %s1331 = sand.u32 %s195, 1
          %s1332 = scalar_lea.sflag [#allocation4], %s1331
          %s1333 = sand.u32 %s195, 1
          %s1334 = smul.addr %s1333, 2
          %s1335 = scalar_lea.vmem [#allocation3], %s1334
          %1336 = dma.done %s1332, 32
        $region64: #{basic_attn_forward.4} parent=55 // pred_fallthru
          _
      $region56: #{basic_attn_forward.4} parent=5 // pred_fallthru
        _
    $region6: #{basic_attn_forward.4} parent=1 // loop_footer
      %s19 = sadd.s32 1, %s15
    $region7: #{basic_attn_forward.4} parent=1 // loop_footer_branch
      %14 = sbr.rel target = $region3
    $region8: #{basic_attn_forward.4} parent=1 // loop_exit
      _
    %1337 = vsyncpa [#allocation4], 1
    %s1338 = scalar_lea.sflag [#allocation4], 1
    %1339 = vsyncpa %s1338, 1

</llo_original>
